<compile_context>
chip_gen: v5e
topology: v5e:2x2
jax: 0.10.0
libtpu: 0.0.40
codegen_flags: <defaults>
</compile_context>

<pallas_src>
import functools
import math

import jax
import jax.numpy as jnp
from jax import lax
from jax.experimental import pallas as pl
from jax.experimental.pallas import tpu as pltpu

_INV_SQRT2 = 1.0 / math.sqrt(2.0)
_SQRT_2_OVER_PI = math.sqrt(2.0 / math.pi)
_LANE = 128


def _gelu_exact(x):
    # PyTorch nn.GELU() default = exact erf formulation (computed in f32).
    return 0.5 * x * (1.0 + lax.erf(x * _INV_SQRT2))


def _gelu_tanh(x):
    # tanh-approximate GELU: transcendental rides the EUP slot on v6e/v7x.
    return 0.5 * x * (1.0 + jnp.tanh(_SQRT_2_OVER_PI * (x + 0.044715 * x * x * x)))


# --------------------------------------------------------------------------- #
# Kernels
# --------------------------------------------------------------------------- #
@functools.lru_cache(maxsize=None)
def _make_kernel(approx_gelu: bool, acc_in_out: bool):
    gelu = _gelu_tanh if approx_gelu else _gelu_exact

    if acc_in_out:
        # f32 output: accumulate directly in the (resident) output tile,
        # no separate f32 scratch needed.
        def kernel(x_ref, w1_ref, b1_ref, w2_ref, b2_ref, o_ref):
            h_idx = pl.program_id(1)
            h = jnp.dot(x_ref[...], w1_ref[...],
                        preferred_element_type=jnp.float32)
            h = gelu(h + b1_ref[...].astype(jnp.float32))
            h = h.astype(w2_ref.dtype)
            partial = jnp.dot(h, w2_ref[...],
                              preferred_element_type=jnp.float32)

            @pl.when(h_idx == 0)
            def _first():
                o_ref[...] = partial + b2_ref[...].astype(jnp.float32)

            @pl.when(h_idx > 0)
            def _accum():
                o_ref[...] += partial

        return kernel

    # Non-f32 output: f32 VMEM accumulator scratch, cast on the last chunk.
    def kernel(x_ref, w1_ref, b1_ref, w2_ref, b2_ref, o_ref, acc_ref):
        h_idx = pl.program_id(1)
        h = jnp.dot(x_ref[...], w1_ref[...],
                    preferred_element_type=jnp.float32)
        h = gelu(h + b1_ref[...].astype(jnp.float32))
        h = h.astype(w2_ref.dtype)
        partial = jnp.dot(h, w2_ref[...],
                          preferred_element_type=jnp.float32)

        @pl.when(h_idx == 0)
        def _first():
            acc_ref[...] = partial + b2_ref[...].astype(jnp.float32)

        @pl.when(h_idx > 0)
        def _accum():
            acc_ref[...] += partial

        @pl.when(h_idx == pl.num_programs(1) - 1)
        def _finalize():
            o_ref[...] = acc_ref[...].astype(o_ref.dtype)

    return kernel


# --------------------------------------------------------------------------- #
# Generation-aware tile selection
# --------------------------------------------------------------------------- #
def _round_up(x, m):
    return ((x + m - 1) // m) * m


def _tpu_generation():
    """Return (generation_tag, vmem_capacity_bytes)."""
    kind = ""
    try:
        kind = jax.devices()[0].device_kind.lower()
    except Exception:
        pass
    if "v7" in kind:
        gen, vmem = "v7x", 64 << 20
    elif "v6" in kind:
        gen, vmem = "v6e", 128 << 20
    elif "v5" in kind and ("lite" in kind or "v5e" in kind):
        gen, vmem = "v5e", 128 << 20
    else:
        gen, vmem = "other", 128 << 20
    try:  # prefer the real number when the API is available
        info_vmem = int(getattr(pltpu.get_tpu_info(), "vmem_capacity_bytes", 0) or 0)
        if info_vmem > 0:
            vmem = info_vmem
    except Exception:
        pass
    return gen, vmem


def _block_h_candidates(hidden, max_h):
    """Return (hidden_pad, descending block_h candidates that divide hidden_pad)."""
    if hidden % _LANE == 0:
        cands = [c for c in (1024, 512, 384, 256, 128)
                 if c <= max_h and hidden % c == 0]
        if hidden <= max_h:
            cands.append(hidden)
        return hidden, sorted(set(cands), reverse=True)
    if hidden <= 4096:
        # block equal to the full (non lane-aligned) dim is always legal
        return hidden, [hidden]
    hidden_pad = _round_up(hidden, 256)
    cands = [c for c in (1024, 512, 256, 128)
             if c <= max_h and hidden_pad % c == 0]
    if not cands:
        hidden_pad = _round_up(hidden, _LANE)
        cands = [_LANE]
    return hidden_pad, cands


def _footprint(block_m, block_h, dim, x_b, w_b, need_acc):
    """Generous VMEM footprint estimate (double-buffered pipelined operands)."""
    fp = (2 * block_m * dim * x_b          # x tile
          + 2 * dim * block_h * w_b        # W1 slice
          + 2 * block_h * dim * w_b        # W2 slice
          + 2 * block_m * dim * x_b        # out tile
          + 2 * 8 * (block_h + dim) * 4    # biases (sublane padded, generous)
          + 2 * block_m * block_h * 4)     # first matmul / GELU f32 intermediates
    if need_acc:
        fp += block_m * dim * 4            # f32 accumulator scratch
    return fp


def _select_tiles(M, dim, hidden, x_itemsize, w_itemsize, gen, vmem_budget,
                  need_acc, block_m=None, block_h=None):
    if gen == "v6e":
        target_m, max_h = 1024, 1024
    elif gen == "v7x":
        target_m, max_h = 512, 512
    elif gen == "v5e":
        target_m, max_h = 512, 1024
    else:
        target_m, max_h = 512, 512

    if block_h is not None:
        h_cands = [int(block_h)]
    else:
        _, h_cands = _block_h_candidates(hidden, max_h)

    if block_m is None:
        bm = min(target_m, _round_up(max(M, 1), 8))
        if gen == "v7x" and M > 16:
            # keep >= 2 token tiles so both TensorCores get work
            bm = min(bm, max(8, _round_up(pl.cdiv(M, 2), 8)))
        bm = max(8, bm)
    else:
        bm = max(8, _round_up(int(block_m), 8))

    hi = 0
    bh = h_cands[hi]
    if block_m is None or block_h is None:
        while _footprint(bm, bh, dim, x_itemsize, w_itemsize, need_acc) > vmem_budget:
            if block_m is None and bm > 256:
                bm = max(256, _round_up(bm // 2, 8))
            elif block_h is None and hi + 1 < len(h_cands):
                hi += 1
                bh = h_cands[hi]
            elif block_m is None and bm > 64:
                bm = max(64, _round_up(bm // 2, 8))
            else:
                break
    return int(bm), int(bh)


# --------------------------------------------------------------------------- #
# pallas_call wrapper
# --------------------------------------------------------------------------- #
@functools.partial(
    jax.jit, static_argnames=("block_m", "block_h", "approx_gelu", "vmem_limit"))
def _ffn_impl(x2d, w1, b1, w2, b2, *, block_m, block_h, approx_gelu, vmem_limit):
    M, dim = x2d.shape
    hidden = w1.shape[1]

    grid_m = pl.cdiv(M, block_m)           # ragged trailing token block is fine:
    grid_h = pl.cdiv(hidden, block_h)      # each output row depends only on its row
    hidden_pad = grid_h * block_h
    if hidden_pad != hidden:
        # hidden is a reduction axis -> pad with zeros (gelu(0+0)=0 contributes 0)
        w1 = jnp.pad(w1, ((0, 0), (0, hidden_pad - hidden)))
        b1 = jnp.pad(b1, ((0, 0), (0, hidden_pad - hidden)))
        w2 = jnp.pad(w2, ((0, hidden_pad - hidden), (0, 0)))

    acc_in_out = (x2d.dtype == jnp.float32)
    kernel = _make_kernel(bool(approx_gelu), bool(acc_in_out))
    scratch = [] if acc_in_out else [pltpu.VMEM((block_m, dim), jnp.float32)]

    x_b = jnp.dtype(x2d.dtype).itemsize
    w_b = jnp.dtype(w1.dtype).itemsize
    cost = pl.CostEstimate(
        flops=4 * M * dim * hidden,                 # two matmuls
        transcendentals=M * hidden,                 # one erf/tanh per hidden act
        bytes_accessed=(2 * M * dim * x_b           # x in + out
                        + grid_m * (w1.size + w2.size) * w_b   # weights re-streamed
                        + (b1.size + b2.size) * 4),
    )

    out2d = pl.pallas_call(
        kernel,
        out_shape=jax.ShapeDtypeStruct((M, dim), x2d.dtype),
        grid_spec=pltpu.PrefetchScalarGridSpec(
            num_scalar_prefetch=0,
            grid=(grid_m, grid_h),                  # hidden (reduction) axis last
            in_specs=[
                pl.BlockSpec((block_m, dim), lambda i, h: (i, 0)),   # x tile
                pl.BlockSpec((dim, block_h), lambda i, h: (0, h)),   # W1 slice
                pl.BlockSpec((1, block_h), lambda i, h: (0, h)),     # b1 slice
                pl.BlockSpec((block_h, dim), lambda i, h: (h, 0)),   # W2 slice
                pl.BlockSpec((1, dim), lambda i, h: (0, 0)),         # b2 (full)
            ],
            out_specs=pl.BlockSpec((block_m, dim), lambda i, h: (i, 0)),
            scratch_shapes=scratch,
        ),
        compiler_params=pltpu.CompilerParams(
            dimension_semantics=("parallel", "arbitrary"),
            vmem_limit_bytes=int(vmem_limit),
        ),
        cost_estimate=cost,
    )(x2d, w1, b1, w2, b2)
    return out2d


def feed_forward(x, w1, b1, w2, b2, *, block_m=None, block_h=None, approx_gelu=None):
    """x: (batch, seq, dim) -> (batch, seq, dim)."""
    B, S, dim = x.shape
    hidden = w1.shape[1]
    M = B * S
    b1 = b1.reshape(1, -1)
    b2 = b2.reshape(1, -1)

    gen, vmem_cap = _tpu_generation()
    if approx_gelu is None:
        # tanh-approx rides the EUP on v6e/v7x; keep exact-erf (PyTorch default)
        # elsewhere.  TODO(synk): expose as a config flag in the caller.
        approx_gelu = gen in ("v6e", "v7x")

    budget = max(32 << 20, vmem_cap - (6 << 20))
    need_acc = (x.dtype != jnp.float32)
    bm, bh = _select_tiles(
        M, dim, hidden,
        jnp.dtype(x.dtype).itemsize, jnp.dtype(w1.dtype).itemsize,
        gen, budget, need_acc, block_m=block_m, block_h=block_h)

    x2d = x.reshape(M, dim)
    out2d = _ffn_impl(x2d, w1, b1, w2, b2,
                      block_m=bm, block_h=bh,
                      approx_gelu=bool(approx_gelu), vmem_limit=int(budget))
    return out2d.reshape(B, S, dim)


# --------------------------------------------------------------------------- #
# Reference + init
# --------------------------------------------------------------------------- #
def init_params(key, dim, hidden_dim, dtype=jnp.float32):
    """Deterministic init matching nn.Linear shapes (stored transposed)."""
    k1, k2, k3, k4 = jax.random.split(key, 4)
    bound1 = 1.0 / math.sqrt(dim)
    bound2 = 1.0 / math.sqrt(hidden_dim)
    w1 = jax.random.uniform(k1, (dim, hidden_dim), dtype, -bound1, bound1)
    b1 = jax.random.uniform(k2, (1, hidden_dim), dtype, -bound1, bound1)
    w2 = jax.random.uniform(k3, (hidden_dim, dim), dtype, -bound2, bound2)
    b2 = jax.random.uniform(k4, (1, dim), dtype, -bound2, bound2)
    return w1, b1, w2, b2


def feed_forward_ref(x, w1, b1, w2, b2, *, approx_gelu=False):
    gelu = _gelu_tanh if approx_gelu else _gelu_exact
    h = gelu(jnp.dot(x, w1) + b1.reshape(-1))
    return jnp.dot(h, w2) + b2.reshape(-1)


if __name__ == "__main__":
    # Small but lane-aligned shapes (dim=128, hidden=256).
    batch, seq, dim, hidden_dim = 2, 64, 128, 256

    key = jax.random.PRNGKey(0)
    kx, kp = jax.random.split(key)
    x = jax.random.normal(kx, (batch, seq, dim), jnp.float32)
    w1, b1, w2, b2 = init_params(kp, dim, hidden_dim)

    # 1) Auto-tiled path, exact-erf GELU (PyTorch nn.GELU default numerics).
    out = feed_forward(x, w1, b1, w2, b2, approx_gelu=False)
    out = jax.block_until_ready(out)
    ref = feed_forward_ref(x, w1, b1, w2, b2, approx_gelu=False)
    assert out.shape == (batch, seq, dim)
    assert jnp.allclose(out, ref, atol=1e-3, rtol=1e-3), "mismatch (exact GELU)"

    # 2) Ragged token tiling (block_m=48 does not divide M=128) + hidden
    #    streaming (block_h=128 -> 2 chunks) + tanh-approximate GELU.
    out2 = feed_forward(x, w1, b1, w2, b2, block_m=48, block_h=128,
                        approx_gelu=True)
    out2 = jax.block_until_ready(out2)
    ref2 = feed_forward_ref(x, w1, b1, w2, b2, approx_gelu=True)
    assert jnp.allclose(out2, ref2, atol=1e-3, rtol=1e-3), "mismatch (tanh GELU)"

    # 3) bf16 path: exercises the f32 VMEM accumulator scratch variant.
    xb = x.astype(jnp.bfloat16)
    w1b, b1b, w2b, b2b = (a.astype(jnp.bfloat16) for a in (w1, b1, w2, b2))
    out3 = feed_forward(xb, w1b, b1b, w2b, b2b, approx_gelu=False)
    out3 = jax.block_until_ready(out3)
    assert out3.shape == (batch, seq, dim)
    assert jnp.allclose(out3.astype(jnp.float32), ref, atol=5e-2, rtol=5e-2), \
        "mismatch (bf16)"

    print("KERNEL_OK")
</pallas_src>

<mosaic_0001>
module attributes {stable_mosaic.version = 11 : i64} {
  func.func @kernel(%arg0: i32, %arg1: i32, %arg2: memref<128x128xf32, #tpu.memory_space<vmem>>, %arg3: memref<128x256xf32, #tpu.memory_space<vmem>>, %arg4: memref<1x256xf32, #tpu.memory_space<vmem>>, %arg5: memref<256x128xf32, #tpu.memory_space<vmem>>, %arg6: memref<1x128xf32, #tpu.memory_space<vmem>>, %arg7: memref<128x128xf32, #tpu.memory_space<vmem>>) attributes {dimension_semantics = [#tpu.dimension_semantics<parallel>, #tpu.dimension_semantics<arbitrary>], iteration_bounds = array<i64: 1, 1>, scalar_prefetch = 0 : i64, scratch_operands = 0 : i64, tpu.core_type = #tpu.core_type<tc>, window_params = [{transform_indices = @transform_0, window_bounds = array<i64: 128, 128>}, {transform_indices = @transform_1, window_bounds = array<i64: 128, 256>}, {transform_indices = @transform_2, window_bounds = array<i64: 1, 256>}, {transform_indices = @transform_3, window_bounds = array<i64: 256, 128>}, {pipeline_mode = #tpu.pipeline_mode<synchronous>, transform_indices = @transform_4, window_bounds = array<i64: 1, 128>}, {transform_indices = @transform_5, window_bounds = array<i64: 128, 128>}]} {
    %c0 = arith.constant 0 : index
    %c0_0 = arith.constant 0 : index
    %0 = vector.load %arg2[%c0, %c0_0] : memref<128x128xf32, #tpu.memory_space<vmem>>, vector<128x128xf32>
    %c0_1 = arith.constant 0 : index
    %c0_2 = arith.constant 0 : index
    %1 = vector.load %arg3[%c0_1, %c0_2] : memref<128x256xf32, #tpu.memory_space<vmem>>, vector<128x256xf32>
    %cst = arith.constant dense<0.000000e+00> : vector<128x256xf32>
    %2 = tpu.matmul %0, %1, %cst {dimension_numbers = #tpu.dot_dimension_numbers<[1], [0], [0], [1], [0, 0, 1, 1], [], []>} : vector<128x128xf32>, vector<128x256xf32>, vector<128x256xf32> -> vector<128x256xf32>
    %c0_3 = arith.constant 0 : index
    %c0_4 = arith.constant 0 : index
    %3 = vector.load %arg4[%c0_3, %c0_4] : memref<1x256xf32, #tpu.memory_space<vmem>>, vector<1x256xf32>
    %4 = vector.broadcast %3 : vector<1x256xf32> to vector<128x256xf32>
    %5 = arith.addf %2, %4 : vector<128x256xf32>
    %cst_5 = arith.constant 5.000000e-01 : f32
    %6 = vector.broadcast %cst_5 : f32 to vector<128x256xf32>
    %7 = arith.mulf %6, %5 : vector<128x256xf32>
    %cst_6 = arith.constant 0.707106769 : f32
    %8 = vector.broadcast %cst_6 : f32 to vector<128x256xf32>
    %9 = arith.mulf %5, %8 : vector<128x256xf32>
    %10 = math.erf %9 : vector<128x256xf32>
    %cst_7 = arith.constant 1.000000e+00 : f32
    %11 = vector.broadcast %cst_7 : f32 to vector<128x256xf32>
    %12 = arith.addf %11, %10 : vector<128x256xf32>
    %13 = arith.mulf %7, %12 : vector<128x256xf32>
    %c0_8 = arith.constant 0 : index
    %c0_9 = arith.constant 0 : index
    %14 = vector.load %arg5[%c0_8, %c0_9] : memref<256x128xf32, #tpu.memory_space<vmem>>, vector<256x128xf32>
    %cst_10 = arith.constant dense<0.000000e+00> : vector<128x128xf32>
    %15 = tpu.matmul %13, %14, %cst_10 {dimension_numbers = #tpu.dot_dimension_numbers<[1], [0], [0], [1], [0, 0, 1, 1], [], []>} : vector<128x256xf32>, vector<256x128xf32>, vector<128x128xf32> -> vector<128x128xf32>
    %c0_i32 = arith.constant 0 : i32
    %16 = arith.cmpi eq, %arg1, %c0_i32 : i32
    %17 = arith.extui %16 : i1 to i32
    %c0_i32_11 = arith.constant 0 : i32
    %18 = arith.cmpi ne, %17, %c0_i32_11 : i32
    scf.if %18 {
      %c0_14 = arith.constant 0 : index
      %c0_15 = arith.constant 0 : index
      %22 = vector.load %arg6[%c0_14, %c0_15] : memref<1x128xf32, #tpu.memory_space<vmem>>, vector<1x128xf32>
      %23 = vector.broadcast %22 : vector<1x128xf32> to vector<128x128xf32>
      %24 = arith.addf %15, %23 : vector<128x128xf32>
      %c0_16 = arith.constant 0 : index
      %c0_17 = arith.constant 0 : index
      %25 = vector.load %arg7[%c0_16, %c0_17] : memref<128x128xf32, #tpu.memory_space<vmem>>, vector<128x128xf32>
      tpu.vector_store %arg7[%c0_16, %c0_17], %24 {strides = array<i32>} : memref<128x128xf32, #tpu.memory_space<vmem>>, vector<128x128xf32>,
    } else {
    }
    %c0_i32_12 = arith.constant 0 : i32
    %19 = arith.cmpi sgt, %arg1, %c0_i32_12 : i32
    %20 = arith.extui %19 : i1 to i32
    %c0_i32_13 = arith.constant 0 : i32
    %21 = arith.cmpi ne, %20, %c0_i32_13 : i32
    scf.if %21 {
      %c0_14 = arith.constant 0 : index
      %c0_15 = arith.constant 0 : index
      %22 = vector.load %arg7[%c0_14, %c0_15] : memref<128x128xf32, #tpu.memory_space<vmem>>, vector<128x128xf32>
      %23 = arith.addf %22, %15 : vector<128x128xf32>
      %c0_16 = arith.constant 0 : index
      %c0_17 = arith.constant 0 : index
      %24 = vector.load %arg7[%c0_16, %c0_17] : memref<128x128xf32, #tpu.memory_space<vmem>>, vector<128x128xf32>
      tpu.vector_store %arg7[%c0_16, %c0_17], %23 {strides = array<i32>} : memref<128x128xf32, #tpu.memory_space<vmem>>, vector<128x128xf32>,
    } else {
    }
    return
  }
  func.func @transform_0(%arg0: i32, %arg1: i32) -> (i32, i32) {
    %c0_i32 = arith.constant 0 : i32
    %c0_i32_0 = arith.constant 0 : i32
    return %arg0, %c0_i32 : i32, i32
  }
  func.func @transform_1(%arg0: i32, %arg1: i32) -> (i32, i32) {
    %c0_i32 = arith.constant 0 : i32
    %c0_i32_0 = arith.constant 0 : i32
    return %c0_i32, %arg1 : i32, i32
  }
  func.func @transform_2(%arg0: i32, %arg1: i32) -> (i32, i32) {
    %c0_i32 = arith.constant 0 : i32
    %c0_i32_0 = arith.constant 0 : i32
    return %c0_i32, %arg1 : i32, i32
  }
  func.func @transform_3(%arg0: i32, %arg1: i32) -> (i32, i32) {
    %c0_i32 = arith.constant 0 : i32
    %c0_i32_0 = arith.constant 0 : i32
    return %arg1, %c0_i32 : i32, i32
  }
  func.func @transform_4(%arg0: i32, %arg1: i32) -> (i32, i32) {
    %c0_i32 = arith.constant 0 : i32
    %c0_i32_0 = arith.constant 0 : i32
    %c0_i32_1 = arith.constant 0 : i32
    return %c0_i32, %c0_i32_0 : i32, i32
  }
  func.func @transform_5(%arg0: i32, %arg1: i32) -> (i32, i32) {
    %c0_i32 = arith.constant 0 : i32
    %c0_i32_0 = arith.constant 0 : i32
    return %arg0, %c0_i32 : i32, i32
  }
}

</mosaic_0001>

<llo_original>
// kernel: _ffn_impl.1
$region0: #{_ffn_impl.1}
  #allocation0 [shape = 'u32[]', space=smem, size = 0x4, offset = 0x4, fixed_abs, tag = 'smem constant byte address 0x4 - core index']
  #allocation1 [shape = 'u32[72,128]{1,0:T(1,128)}', space=vmem, size = 0x9000, scoped, tag = 'internal scratch']
  %s0 = inlined_call_operand.hbm [shape: f32[128,128], index: 0, kind: input, shape index: {}]
  %s1 = inlined_call_operand.hbm [shape: f32[128,256], index: 1, kind: input, shape index: {}]
  %s2 = inlined_call_operand.hbm [shape: f32[1,256], index: 2, kind: input, shape index: {}]
  %s3 = inlined_call_operand.hbm [shape: f32[256,128], index: 3, kind: input, shape index: {}]
  %s4 = inlined_call_operand.vmem [shape: f32[1,128], index: 4, kind: input, shape index: {}]
  %s5 = inlined_call_operand.hbm [shape: f32[128,128], index: 5, kind: output, shape index: {}]
  %s6 = sld [smem:[#allocation0]]
  $region54: #{_ffn_impl.1} parent=0
    _
  %s8 = ssub.s32 1, %s6
  %s9 = scalar_select 0, %s8, %s6
  $region1: #{_ffn_impl.1} parent=0
    #allocation2 [shape = 'u8[65536]{0}', space=vmem, size = 0x10000, scoped, tag = 'input window, operand 0, single buffered']
    #allocation3 [shape = 's32[1]{0}', space=sflag, size = 0x4, scoped, tag = 'scoped memory for _ffn_impl.1']
    #allocation4 [shape = 's32[1]{0}', space=sflag, size = 0x4, scoped, tag = 'scoped memory for _ffn_impl.1']
    #allocation5 [shape = 'u8[131072]{0}', space=vmem, size = 0x20000, scoped, tag = 'input window, operand 1, single buffered']
    #allocation6 [shape = 's32[1]{0}', space=sflag, size = 0x4, scoped, tag = 'scoped memory for _ffn_impl.1']
    #allocation7 [shape = 'u8[1024]{0}', space=vmem, size = 0x400, scoped, tag = 'input window, operand 2, single buffered']
    #allocation8 [shape = 'u8[131072]{0}', space=vmem, size = 0x20000, scoped, tag = 'input window, operand 3, single buffered']
    #allocation9 [shape = 's32[1]{0}', space=sflag, size = 0x4, scoped, tag = 'scoped memory for _ffn_impl.1']
    #allocation10 [shape = 'u8[65536]{0}', space=vmem, size = 0x10000, scoped, tag = 'output window, operand 0, single buffered']
    %10 = vsyncpa [#allocation3], 0
    %11 = vsyncpa [#allocation6], 0
    %12 = vsyncpa [#allocation9], 0
    %13 = vsyncpa [#allocation4], 0
    // Predicated region
    $region2: #{_ffn_impl.1} parent=1 // pred_check
      _
    $region3: #{_ffn_impl.1} parent=1 // pred_check_branch
      %15 = sbr.rel (0) target = $region5
    $region4: #{_ffn_impl.1} parent=1 // pred_region
      %17 = vsyncadd [#allocation3], 0
      %s18 = sshll.u32 %s0, 4
      %s19 = int_to_ptr.hbm [resolvable:$true] %s18
      %s20 = sshll.u32 [#allocation2], 4
      %s21 = int_to_ptr.vmem [resolvable:$true] %s20
      %26 = dma.hbm_to_vmem [thread:$0]  %s19, 2048, %s21, [#allocation3], 128, 128, 8
    $region5: #{_ffn_impl.1} parent=1 // pred_fallthru
      _
    // Predicated region
    $region6: #{_ffn_impl.1} parent=1 // pred_check
      _
    $region7: #{_ffn_impl.1} parent=1 // pred_check_branch
      %28 = sbr.rel (0) target = $region9
    $region8: #{_ffn_impl.1} parent=1 // pred_region
      %30 = vsyncadd [#allocation6], 0
      %s31 = sshll.u32 %s1, 4
      %s32 = int_to_ptr.hbm [resolvable:$true] %s31
      %s33 = sshll.u32 [#allocation5], 4
      %s34 = int_to_ptr.vmem [resolvable:$true] %s33
      %39 = dma.hbm_to_vmem [thread:$0]  %s32, 4096, %s34, [#allocation6], 256, 256, 16
    $region9: #{_ffn_impl.1} parent=1 // pred_fallthru
      _
    // Predicated region
    $region10: #{_ffn_impl.1} parent=1 // pred_check
      _
    $region11: #{_ffn_impl.1} parent=1 // pred_check_branch
      %41 = sbr.rel (0) target = $region13
    $region12: #{_ffn_impl.1} parent=1 // pred_region
      %43 = vsyncadd [#allocation6], 0
      %s45 = sshll.u32 %s2, 4
      %s46 = int_to_ptr.hbm [resolvable:$true] %s45
      %s47 = sshll.u32 [#allocation7], 4
      %s48 = int_to_ptr.vmem [resolvable:$true] %s47
      %50 = dma.hbm_to_vmem [thread:$0]  %s46, 32, %s48, [#allocation6]
    $region13: #{_ffn_impl.1} parent=1 // pred_fallthru
      _
    // Predicated region
    $region14: #{_ffn_impl.1} parent=1 // pred_check
      _
    $region15: #{_ffn_impl.1} parent=1 // pred_check_branch
      %52 = sbr.rel (0) target = $region17
    $region16: #{_ffn_impl.1} parent=1 // pred_region
      %54 = vsyncadd [#allocation9], 0
      %s55 = sshll.u32 %s3, 4
      %s56 = int_to_ptr.hbm [resolvable:$true] %s55
      %s57 = sshll.u32 [#allocation8], 4
      %s58 = int_to_ptr.vmem [resolvable:$true] %s57
      %63 = dma.hbm_to_vmem [thread:$0]  %s56, 4096, %s58, [#allocation9], 128, 128, 8
    $region17: #{_ffn_impl.1} parent=1 // pred_fallthru
      _
    // Predicated region
    $region18: #{_ffn_impl.1} parent=1 // pred_check
      _
    $region19: #{_ffn_impl.1} parent=1 // pred_check_branch
      %65 = sbr.rel (0) target = $region21
    $region20: #{_ffn_impl.1} parent=1 // pred_region
      _
    $region21: #{_ffn_impl.1} parent=1 // pred_fallthru
      _
    // Predicated region
    $region22: #{_ffn_impl.1} parent=1 // pred_check
      _
    $region23: #{_ffn_impl.1} parent=1 // pred_check_branch
      %67 = sbr.rel (0) target = $region25
    $region24: #{_ffn_impl.1} parent=1 // pred_region
      %69 = dma.done [#allocation3], 2048
    $region25: #{_ffn_impl.1} parent=1 // pred_fallthru
      _
    // Predicated region
    $region26: #{_ffn_impl.1} parent=1 // pred_check
      _
    $region27: #{_ffn_impl.1} parent=1 // pred_check_branch
      %71 = sbr.rel (0) target = $region29
    $region28: #{_ffn_impl.1} parent=1 // pred_region
      %73 = dma.done [#allocation6], 4096
    $region29: #{_ffn_impl.1} parent=1 // pred_fallthru
      _
    // Predicated region
    $region30: #{_ffn_impl.1} parent=1 // pred_check
      _
    $region31: #{_ffn_impl.1} parent=1 // pred_check_branch
      %75 = sbr.rel (0) target = $region33
    $region32: #{_ffn_impl.1} parent=1 // pred_region
      %77 = dma.done [#allocation6], 32
    $region33: #{_ffn_impl.1} parent=1 // pred_fallthru
      _
    // Predicated region
    $region34: #{_ffn_impl.1} parent=1 // pred_check
      _
    $region35: #{_ffn_impl.1} parent=1 // pred_check_branch
      %79 = sbr.rel (0) target = $region37
    $region36: #{_ffn_impl.1} parent=1 // pred_region
      %81 = dma.done [#allocation9], 4096
    $region37: #{_ffn_impl.1} parent=1 // pred_fallthru
      _
    %v82 = vld [vmem:[#allocation2] sm:$0xff]
    %v83 = vld [vmem:[#allocation2 + $0x8] sm:$0xff]
    %v84 = vld [vmem:[#allocation2 + $0x10] sm:$0xff]
    %v85 = vld [vmem:[#allocation2 + $0x18] sm:$0xff]
    %v86 = vld [vmem:[#allocation2 + $0x20] sm:$0xff]
    %v87 = vld [vmem:[#allocation2 + $0x28] sm:$0xff]
    %v88 = vld [vmem:[#allocation2 + $0x30] sm:$0xff]
    %v89 = vld [vmem:[#allocation2 + $0x38] sm:$0xff]
    %v90 = vld [vmem:[#allocation2 + $0x40] sm:$0xff]
    %v91 = vld [vmem:[#allocation2 + $0x48] sm:$0xff]
    %v92 = vld [vmem:[#allocation2 + $0x50] sm:$0xff]
    %v93 = vld [vmem:[#allocation2 + $0x58] sm:$0xff]
    %v94 = vld [vmem:[#allocation2 + $0x60] sm:$0xff]
    %v95 = vld [vmem:[#allocation2 + $0x68] sm:$0xff]
    %v96 = vld [vmem:[#allocation2 + $0x70] sm:$0xff]
    %v97 = vld [vmem:[#allocation2 + $0x78] sm:$0xff]
    %v98 = vld [vmem:[#allocation5] sm:$0xff]
    %v99 = vld [vmem:[#allocation5 + $0x8] sm:$0xff]
    %v100 = vld [vmem:[#allocation5 + $0x10] sm:$0xff]
    %v101 = vld [vmem:[#allocation5 + $0x18] sm:$0xff]
    %v102 = vld [vmem:[#allocation5 + $0x20] sm:$0xff]
    %v103 = vld [vmem:[#allocation5 + $0x28] sm:$0xff]
    %v104 = vld [vmem:[#allocation5 + $0x30] sm:$0xff]
    %v105 = vld [vmem:[#allocation5 + $0x38] sm:$0xff]
    %v106 = vld [vmem:[#allocation5 + $0x40] sm:$0xff]
    %v107 = vld [vmem:[#allocation5 + $0x48] sm:$0xff]
    %v108 = vld [vmem:[#allocation5 + $0x50] sm:$0xff]
    %v109 = vld [vmem:[#allocation5 + $0x58] sm:$0xff]
    %v110 = vld [vmem:[#allocation5 + $0x60] sm:$0xff]
    %v111 = vld [vmem:[#allocation5 + $0x68] sm:$0xff]
    %v112 = vld [vmem:[#allocation5 + $0x70] sm:$0xff]
    %v113 = vld [vmem:[#allocation5 + $0x78] sm:$0xff]
    %v114 = vld [vmem:[#allocation5 + $0x80] sm:$0xff]
    %v115 = vld [vmem:[#allocation5 + $0x88] sm:$0xff]
    %v116 = vld [vmem:[#allocation5 + $0x90] sm:$0xff]
    %v117 = vld [vmem:[#allocation5 + $0x98] sm:$0xff]
    %v118 = vld [vmem:[#allocation5 + $0xa0] sm:$0xff]
    %v119 = vld [vmem:[#allocation5 + $0xa8] sm:$0xff]
    %v120 = vld [vmem:[#allocation5 + $0xb0] sm:$0xff]
    %v121 = vld [vmem:[#allocation5 + $0xb8] sm:$0xff]
    %v122 = vld [vmem:[#allocation5 + $0xc0] sm:$0xff]
    %v123 = vld [vmem:[#allocation5 + $0xc8] sm:$0xff]
    %v124 = vld [vmem:[#allocation5 + $0xd0] sm:$0xff]
    %v125 = vld [vmem:[#allocation5 + $0xd8] sm:$0xff]
    %v126 = vld [vmem:[#allocation5 + $0xe0] sm:$0xff]
    %v127 = vld [vmem:[#allocation5 + $0xe8] sm:$0xff]
    %v128 = vld [vmem:[#allocation5 + $0xf0] sm:$0xff]
    %v129 = vld [vmem:[#allocation5 + $0xf8] sm:$0xff]
    %v130 = vld [vmem:[#allocation7] sm:$0x3]
    %v132 = vperm.slane %v130, 0
    %v133 = vperm.slane %v130, 1
    %136 = vmatpush.msra.mxu0 %v128
    %137 = vmatpush.msra.mxu0 %v126
    %138 = vmatpush.msra.mxu0 %v124
    %139 = vmatpush.msra.mxu0 %v122
    %140 = vmatpush.msra.mxu0 %v120
    %141 = vmatpush.msra.mxu0 %v118
    %142 = vmatpush.msra.mxu0 %v116
    %143 = vmatpush.msra.mxu0 %v114
    %144 = vmatpush.msra.mxu0 %v112
    %145 = vmatpush.msra.mxu0 %v110
    %146 = vmatpush.msra.mxu0 %v108
    %147 = vmatpush.msra.mxu0 %v106
    %148 = vmatpush.msra.mxu0 %v104
    %149 = vmatpush.msra.mxu0 %v102
    %150 = vmatpush.msra.mxu0 %v100
    %151 = vmatpush.msra.mxu0 %v98
    %152 = vmatmul.f32.gmra.mxu0 %v82
    %v153 = vpop.f32.mrf.mxu0
    %v154 = vadd.f32 %v132, %v153
    %155 = vmatmul.f32.gmra.mxu0 %v83
    %v156 = vpop.f32.mrf.mxu0
    %v157 = vadd.f32 %v132, %v156
    %158 = vmatmul.f32.gmra.mxu0 %v84
    %v159 = vpop.f32.mrf.mxu0
    %v160 = vadd.f32 %v132, %v159
    %161 = vmatmul.f32.gmra.mxu0 %v85
    %v162 = vpop.f32.mrf.mxu0
    %v163 = vadd.f32 %v132, %v162
    %164 = vmatmul.f32.gmra.mxu0 %v86
    %v165 = vpop.f32.mrf.mxu0
    %v166 = vadd.f32 %v132, %v165
    %167 = vmatmul.f32.gmra.mxu0 %v87
    %v168 = vpop.f32.mrf.mxu0
    %v169 = vadd.f32 %v132, %v168
    %170 = vmatmul.f32.gmra.mxu0 %v88
    %v171 = vpop.f32.mrf.mxu0
    %v172 = vadd.f32 %v132, %v171
    %173 = vmatmul.f32.gmra.mxu0 %v89
    %v174 = vpop.f32.mrf.mxu0
    %v175 = vadd.f32 %v132, %v174
    %176 = vmatmul.f32.gmra.mxu0 %v90
    %v177 = vpop.f32.mrf.mxu0
    %v178 = vadd.f32 %v132, %v177
    %179 = vmatmul.f32.gmra.mxu0 %v91
    %v180 = vpop.f32.mrf.mxu0
    %v181 = vadd.f32 %v132, %v180
    %182 = vmatmul.f32.gmra.mxu0 %v92
    %v183 = vpop.f32.mrf.mxu0
    %v184 = vadd.f32 %v132, %v183
    %185 = vmatmul.f32.gmra.mxu0 %v93
    %v186 = vpop.f32.mrf.mxu0
    %v187 = vadd.f32 %v132, %v186
    %188 = vmatmul.f32.gmra.mxu0 %v94
    %v189 = vpop.f32.mrf.mxu0
    %v190 = vadd.f32 %v132, %v189
    %191 = vmatmul.f32.gmra.mxu0 %v95
    %v192 = vpop.f32.mrf.mxu0
    %v193 = vadd.f32 %v132, %v192
    %194 = vmatmul.f32.gmra.mxu0 %v96
    %v195 = vpop.f32.mrf.mxu0
    %v196 = vadd.f32 %v132, %v195
    %197 = vmatmul.f32.gmra.mxu0 %v97
    %v198 = vpop.f32.mrf.mxu0
    %v199 = vadd.f32 %v132, %v198
    %200 = vdwg.mxu0
    %201 = vmatpush.msra.mxu0 %v129
    %202 = vmatpush.msra.mxu0 %v127
    %203 = vmatpush.msra.mxu0 %v125
    %204 = vmatpush.msra.mxu0 %v123
    %205 = vmatpush.msra.mxu0 %v121
    %206 = vmatpush.msra.mxu0 %v119
    %207 = vmatpush.msra.mxu0 %v117
    %208 = vmatpush.msra.mxu0 %v115
    %209 = vmatpush.msra.mxu0 %v113
    %210 = vmatpush.msra.mxu0 %v111
    %211 = vmatpush.msra.mxu0 %v109
    %212 = vmatpush.msra.mxu0 %v107
    %213 = vmatpush.msra.mxu0 %v105
    %214 = vmatpush.msra.mxu0 %v103
    %215 = vmatpush.msra.mxu0 %v101
    %216 = vmatpush.msra.mxu0 %v99
    %217 = vmatmul.f32.gmra.mxu0 %v82
    %v218 = vpop.f32.mrf.mxu0
    %v219 = vadd.f32 %v133, %v218
    %220 = vmatmul.f32.gmra.mxu0 %v83
    %v221 = vpop.f32.mrf.mxu0
    %v222 = vadd.f32 %v133, %v221
    %223 = vmatmul.f32.gmra.mxu0 %v84
    %v224 = vpop.f32.mrf.mxu0
    %v225 = vadd.f32 %v133, %v224
    %226 = vmatmul.f32.gmra.mxu0 %v85
    %v227 = vpop.f32.mrf.mxu0
    %v228 = vadd.f32 %v133, %v227
    %229 = vmatmul.f32.gmra.mxu0 %v86
    %v230 = vpop.f32.mrf.mxu0
    %v231 = vadd.f32 %v133, %v230
    %232 = vmatmul.f32.gmra.mxu0 %v87
    %v233 = vpop.f32.mrf.mxu0
    %v234 = vadd.f32 %v133, %v233
    %235 = vmatmul.f32.gmra.mxu0 %v88
    %v236 = vpop.f32.mrf.mxu0
    %v237 = vadd.f32 %v133, %v236
    %238 = vmatmul.f32.gmra.mxu0 %v89
    %v239 = vpop.f32.mrf.mxu0
    %v240 = vadd.f32 %v133, %v239
    %241 = vmatmul.f32.gmra.mxu0 %v90
    %v242 = vpop.f32.mrf.mxu0
    %v243 = vadd.f32 %v133, %v242
    %244 = vmatmul.f32.gmra.mxu0 %v91
    %v245 = vpop.f32.mrf.mxu0
    %v246 = vadd.f32 %v133, %v245
    %247 = vmatmul.f32.gmra.mxu0 %v92
    %v248 = vpop.f32.mrf.mxu0
    %v249 = vadd.f32 %v133, %v248
    %250 = vmatmul.f32.gmra.mxu0 %v93
    %v251 = vpop.f32.mrf.mxu0
    %v252 = vadd.f32 %v133, %v251
    %253 = vmatmul.f32.gmra.mxu0 %v94
    %v254 = vpop.f32.mrf.mxu0
    %v255 = vadd.f32 %v133, %v254
    %256 = vmatmul.f32.gmra.mxu0 %v95
    %v257 = vpop.f32.mrf.mxu0
    %v258 = vadd.f32 %v133, %v257
    %259 = vmatmul.f32.gmra.mxu0 %v96
    %v260 = vpop.f32.mrf.mxu0
    %v261 = vadd.f32 %v133, %v260
    %262 = vmatmul.f32.gmra.mxu0 %v97
    %v263 = vpop.f32.mrf.mxu0
    %v264 = vadd.f32 %v133, %v263
    %265 = vdwg.mxu0
    %v266 = vmul.f32 %v154, 0.5
    %v267 = vmul.f32 %v219, 0.5
    %v268 = vmul.f32 %v157, 0.5
    %v269 = vmul.f32 %v222, 0.5
    %v270 = vmul.f32 %v160, 0.5
    %v271 = vmul.f32 %v225, 0.5
    %v272 = vmul.f32 %v163, 0.5
    %v273 = vmul.f32 %v228, 0.5
    %v274 = vmul.f32 %v166, 0.5
    %v275 = vmul.f32 %v231, 0.5
    %v276 = vmul.f32 %v169, 0.5
    %v277 = vmul.f32 %v234, 0.5
    %v278 = vmul.f32 %v172, 0.5
    %v279 = vmul.f32 %v237, 0.5
    %v280 = vmul.f32 %v175, 0.5
    %v281 = vmul.f32 %v240, 0.5
    %v282 = vmul.f32 %v178, 0.5
    %v283 = vmul.f32 %v243, 0.5
    %v284 = vmul.f32 %v181, 0.5
    %v285 = vmul.f32 %v246, 0.5
    %v286 = vmul.f32 %v184, 0.5
    %v287 = vmul.f32 %v249, 0.5
    %v288 = vmul.f32 %v187, 0.5
    %v289 = vmul.f32 %v252, 0.5
    %v290 = vmul.f32 %v190, 0.5
    %v291 = vmul.f32 %v255, 0.5
    %v292 = vmul.f32 %v193, 0.5
    %v293 = vmul.f32 %v258, 0.5
    %v294 = vmul.f32 %v196, 0.5
    %v295 = vmul.f32 %v261, 0.5
    %v296 = vmul.f32 %v199, 0.5
    %v297 = vmul.f32 %v264, 0.5
    %v298 = vmul.f32 %v154, 0.70710677
    %v299 = vmul.f32 %v219, 0.70710677
    %v300 = vmul.f32 %v157, 0.70710677
    %v301 = vmul.f32 %v222, 0.70710677
    %v302 = vmul.f32 %v160, 0.70710677
    %v303 = vmul.f32 %v225, 0.70710677
    %v304 = vmul.f32 %v163, 0.70710677
    %v305 = vmul.f32 %v228, 0.70710677
    %v306 = vmul.f32 %v166, 0.70710677
    %v307 = vmul.f32 %v231, 0.70710677
    %v308 = vmul.f32 %v169, 0.70710677
    %v309 = vmul.f32 %v234, 0.70710677
    %v310 = vmul.f32 %v172, 0.70710677
    %v311 = vmul.f32 %v237, 0.70710677
    %v312 = vmul.f32 %v175, 0.70710677
    %v313 = vmul.f32 %v240, 0.70710677
    %v314 = vmul.f32 %v178, 0.70710677
    %v315 = vmul.f32 %v243, 0.70710677
    %v316 = vmul.f32 %v181, 0.70710677
    %v317 = vmul.f32 %v246, 0.70710677
    %v318 = vmul.f32 %v184, 0.70710677
    %v319 = vmul.f32 %v249, 0.70710677
    %v320 = vmul.f32 %v187, 0.70710677
    %v321 = vmul.f32 %v252, 0.70710677
    %v322 = vmul.f32 %v190, 0.70710677
    %v323 = vmul.f32 %v255, 0.70710677
    %v324 = vmul.f32 %v193, 0.70710677
    %v325 = vmul.f32 %v258, 0.70710677
    %v326 = vmul.f32 %v196, 0.70710677
    %v327 = vmul.f32 %v261, 0.70710677
    %v328 = vmul.f32 %v199, 0.70710677
    %v329 = vmul.f32 %v264, 0.70710677
    %v330 = vmul.f32 %v298, %v298
    %v331 = vmin.f32 16.0, %v330
    %v332 = vmul.f32 %v331, 2.1237322e-06
    %v333 = vadd.f32 %v332, 0.00028619796
    %v334 = vmul.f32 %v331, %v333
    %v335 = vadd.f32 %v334, 0.0036580483
    %v336 = vmul.f32 %v331, %v335
    %v337 = vadd.f32 %v336, 0.05243302
    %v338 = vmul.f32 %v331, %v337
    %v339 = vadd.f32 %v338, 0.18741608
    %v340 = vmul.f32 %v331, %v339
    %v341 = vadd.f32 %v340, 1.1283791
    %v342 = vmul.f32 %v298, %v341
    %v343 = vmul.f32 %v331, 3.8918573e-05
    %v344 = vadd.f32 %v343, 0.001143296
    %v345 = vmul.f32 %v331, %v344
    %v346 = vadd.f32 %v345, 0.014752088
    %v347 = vmul.f32 %v331, %v346
    %v348 = vadd.f32 %v347, 0.112945676
    %v349 = vmul.f32 %v331, %v348
    %v350 = vadd.f32 %v349, 0.4994258
    %v351 = vmul.f32 %v331, %v350
    %v352 = vadd.f32 %v351, 1.0
    %v353 = vrcp.pop %v352
    %v354 = vmul.f32 %v352, %v353
    %v355 = vsub.f32 1.0, %v354
    %v356 = vmul.f32 %v353, %v355
    %v357 = vadd.f32 %v353, %v356
    %vm358 = vweird.f32 %v352
    %vm359 = vweird.f32 %v353
    %vm360 = vmor %vm358, %vm359
    %v361 = vsel %vm360, %v353, %v357
    %v362 = vand.u32 2147483647, %v352
    %vm363 = vcmp.eq.f32.partialorder %v362, 8.507059e+37
    %v364 = vand.u32 %v352, 2147483648
    %v365 = vor.u32 1.1754944e-38, %v364
    %v366 = vsel %vm363, %v365, %v361
    %v367 = vmul.f32 %v342, %v366
    %v368 = vmin.f32 %v367, 1.0
    %v369 = vmax.f32 %v368, -1.0
    %v370 = vmul.f32 %v299, %v299
    %v371 = vmin.f32 16.0, %v370
    %v372 = vmul.f32 %v371, 2.1237322e-06
    %v373 = vadd.f32 %v372, 0.00028619796
    %v374 = vmul.f32 %v371, %v373
    %v375 = vadd.f32 %v374, 0.0036580483
    %v376 = vmul.f32 %v371, %v375
    %v377 = vadd.f32 %v376, 0.05243302
    %v378 = vmul.f32 %v371, %v377
    %v379 = vadd.f32 %v378, 0.18741608
    %v380 = vmul.f32 %v371, %v379
    %v381 = vadd.f32 %v380, 1.1283791
    %v382 = vmul.f32 %v299, %v381
    %v383 = vmul.f32 %v371, 3.8918573e-05
    %v384 = vadd.f32 %v383, 0.001143296
    %v385 = vmul.f32 %v371, %v384
    %v386 = vadd.f32 %v385, 0.014752088
    %v387 = vmul.f32 %v371, %v386
    %v388 = vadd.f32 %v387, 0.112945676
    %v389 = vmul.f32 %v371, %v388
    %v390 = vadd.f32 %v389, 0.4994258
    %v391 = vmul.f32 %v371, %v390
    %v392 = vadd.f32 %v391, 1.0
    %v393 = vrcp.pop %v392
    %v394 = vmul.f32 %v392, %v393
    %v395 = vsub.f32 1.0, %v394
    %v396 = vmul.f32 %v393, %v395
    %v397 = vadd.f32 %v393, %v396
    %vm398 = vweird.f32 %v392
    %vm399 = vweird.f32 %v393
    %vm400 = vmor %vm398, %vm399
    %v401 = vsel %vm400, %v393, %v397
    %v402 = vand.u32 2147483647, %v392
    %vm403 = vcmp.eq.f32.partialorder %v402, 8.507059e+37
    %v404 = vand.u32 %v392, 2147483648
    %v405 = vor.u32 1.1754944e-38, %v404
    %v406 = vsel %vm403, %v405, %v401
    %v407 = vmul.f32 %v382, %v406
    %v408 = vmin.f32 %v407, 1.0
    %v409 = vmax.f32 %v408, -1.0
    %v410 = vmul.f32 %v300, %v300
    %v411 = vmin.f32 16.0, %v410
    %v412 = vmul.f32 %v411, 2.1237322e-06
    %v413 = vadd.f32 %v412, 0.00028619796
    %v414 = vmul.f32 %v411, %v413
    %v415 = vadd.f32 %v414, 0.0036580483
    %v416 = vmul.f32 %v411, %v415
    %v417 = vadd.f32 %v416, 0.05243302
    %v418 = vmul.f32 %v411, %v417
    %v419 = vadd.f32 %v418, 0.18741608
    %v420 = vmul.f32 %v411, %v419
    %v421 = vadd.f32 %v420, 1.1283791
    %v422 = vmul.f32 %v300, %v421
    %v423 = vmul.f32 %v411, 3.8918573e-05
    %v424 = vadd.f32 %v423, 0.001143296
    %v425 = vmul.f32 %v411, %v424
    %v426 = vadd.f32 %v425, 0.014752088
    %v427 = vmul.f32 %v411, %v426
    %v428 = vadd.f32 %v427, 0.112945676
    %v429 = vmul.f32 %v411, %v428
    %v430 = vadd.f32 %v429, 0.4994258
    %v431 = vmul.f32 %v411, %v430
    %v432 = vadd.f32 %v431, 1.0
    %v433 = vrcp.pop %v432
    %v434 = vmul.f32 %v432, %v433
    %v435 = vsub.f32 1.0, %v434
    %v436 = vmul.f32 %v433, %v435
    %v437 = vadd.f32 %v433, %v436
    %vm438 = vweird.f32 %v432
    %vm439 = vweird.f32 %v433
    %vm440 = vmor %vm438, %vm439
    %v441 = vsel %vm440, %v433, %v437
    %v442 = vand.u32 2147483647, %v432
    %vm443 = vcmp.eq.f32.partialorder %v442, 8.507059e+37
    %v444 = vand.u32 %v432, 2147483648
    %v445 = vor.u32 1.1754944e-38, %v444
    %v446 = vsel %vm443, %v445, %v441
    %v447 = vmul.f32 %v422, %v446
    %v448 = vmin.f32 %v447, 1.0
    %v449 = vmax.f32 %v448, -1.0
    %v450 = vmul.f32 %v301, %v301
    %v451 = vmin.f32 16.0, %v450
    %v452 = vmul.f32 %v451, 2.1237322e-06
    %v453 = vadd.f32 %v452, 0.00028619796
    %v454 = vmul.f32 %v451, %v453
    %v455 = vadd.f32 %v454, 0.0036580483
    %v456 = vmul.f32 %v451, %v455
    %v457 = vadd.f32 %v456, 0.05243302
    %v458 = vmul.f32 %v451, %v457
    %v459 = vadd.f32 %v458, 0.18741608
    %v460 = vmul.f32 %v451, %v459
    %v461 = vadd.f32 %v460, 1.1283791
    %v462 = vmul.f32 %v301, %v461
    %v463 = vmul.f32 %v451, 3.8918573e-05
    %v464 = vadd.f32 %v463, 0.001143296
    %v465 = vmul.f32 %v451, %v464
    %v466 = vadd.f32 %v465, 0.014752088
    %v467 = vmul.f32 %v451, %v466
    %v468 = vadd.f32 %v467, 0.112945676
    %v469 = vmul.f32 %v451, %v468
    %v470 = vadd.f32 %v469, 0.4994258
    %v471 = vmul.f32 %v451, %v470
    %v472 = vadd.f32 %v471, 1.0
    %v473 = vrcp.pop %v472
    %v474 = vmul.f32 %v472, %v473
    %v475 = vsub.f32 1.0, %v474
    %v476 = vmul.f32 %v473, %v475
    %v477 = vadd.f32 %v473, %v476
    %vm478 = vweird.f32 %v472
    %vm479 = vweird.f32 %v473
    %vm480 = vmor %vm478, %vm479
    %v481 = vsel %vm480, %v473, %v477
    %v482 = vand.u32 2147483647, %v472
    %vm483 = vcmp.eq.f32.partialorder %v482, 8.507059e+37
    %v484 = vand.u32 %v472, 2147483648
    %v485 = vor.u32 1.1754944e-38, %v484
    %v486 = vsel %vm483, %v485, %v481
    %v487 = vmul.f32 %v462, %v486
    %v488 = vmin.f32 %v487, 1.0
    %v489 = vmax.f32 %v488, -1.0
    %v490 = vmul.f32 %v302, %v302
    %v491 = vmin.f32 16.0, %v490
    %v492 = vmul.f32 %v491, 2.1237322e-06
    %v493 = vadd.f32 %v492, 0.00028619796
    %v494 = vmul.f32 %v491, %v493
    %v495 = vadd.f32 %v494, 0.0036580483
    %v496 = vmul.f32 %v491, %v495
    %v497 = vadd.f32 %v496, 0.05243302
    %v498 = vmul.f32 %v491, %v497
    %v499 = vadd.f32 %v498, 0.18741608
    %v500 = vmul.f32 %v491, %v499
    %v501 = vadd.f32 %v500, 1.1283791
    %v502 = vmul.f32 %v302, %v501
    %v503 = vmul.f32 %v491, 3.8918573e-05
    %v504 = vadd.f32 %v503, 0.001143296
    %v505 = vmul.f32 %v491, %v504
    %v506 = vadd.f32 %v505, 0.014752088
    %v507 = vmul.f32 %v491, %v506
    %v508 = vadd.f32 %v507, 0.112945676
    %v509 = vmul.f32 %v491, %v508
    %v510 = vadd.f32 %v509, 0.4994258
    %v511 = vmul.f32 %v491, %v510
    %v512 = vadd.f32 %v511, 1.0
    %v513 = vrcp.pop %v512
    %v514 = vmul.f32 %v512, %v513
    %v515 = vsub.f32 1.0, %v514
    %v516 = vmul.f32 %v513, %v515
    %v517 = vadd.f32 %v513, %v516
    %vm518 = vweird.f32 %v512
    %vm519 = vweird.f32 %v513
    %vm520 = vmor %vm518, %vm519
    %v521 = vsel %vm520, %v513, %v517
    %v522 = vand.u32 2147483647, %v512
    %vm523 = vcmp.eq.f32.partialorder %v522, 8.507059e+37
    %v524 = vand.u32 %v512, 2147483648
    %v525 = vor.u32 1.1754944e-38, %v524
    %v526 = vsel %vm523, %v525, %v521
    %v527 = vmul.f32 %v502, %v526
    %v528 = vmin.f32 %v527, 1.0
    %v529 = vmax.f32 %v528, -1.0
    %v530 = vmul.f32 %v303, %v303
    %v531 = vmin.f32 16.0, %v530
    %v532 = vmul.f32 %v531, 2.1237322e-06
    %v533 = vadd.f32 %v532, 0.00028619796
    %v534 = vmul.f32 %v531, %v533
    %v535 = vadd.f32 %v534, 0.0036580483
    %v536 = vmul.f32 %v531, %v535
    %v537 = vadd.f32 %v536, 0.05243302
    %v538 = vmul.f32 %v531, %v537
    %v539 = vadd.f32 %v538, 0.18741608
    %v540 = vmul.f32 %v531, %v539
    %v541 = vadd.f32 %v540, 1.1283791
    %v542 = vmul.f32 %v303, %v541
    %v543 = vmul.f32 %v531, 3.8918573e-05
    %v544 = vadd.f32 %v543, 0.001143296
    %v545 = vmul.f32 %v531, %v544
    %v546 = vadd.f32 %v545, 0.014752088
    %v547 = vmul.f32 %v531, %v546
    %v548 = vadd.f32 %v547, 0.112945676
    %v549 = vmul.f32 %v531, %v548
    %v550 = vadd.f32 %v549, 0.4994258
    %v551 = vmul.f32 %v531, %v550
    %v552 = vadd.f32 %v551, 1.0
    %v553 = vrcp.pop %v552
    %v554 = vmul.f32 %v552, %v553
    %v555 = vsub.f32 1.0, %v554
    %v556 = vmul.f32 %v553, %v555
    %v557 = vadd.f32 %v553, %v556
    %vm558 = vweird.f32 %v552
    %vm559 = vweird.f32 %v553
    %vm560 = vmor %vm558, %vm559
    %v561 = vsel %vm560, %v553, %v557
    %v562 = vand.u32 2147483647, %v552
    %vm563 = vcmp.eq.f32.partialorder %v562, 8.507059e+37
    %v564 = vand.u32 %v552, 2147483648
    %v565 = vor.u32 1.1754944e-38, %v564
    %v566 = vsel %vm563, %v565, %v561
    %v567 = vmul.f32 %v542, %v566
    %v568 = vmin.f32 %v567, 1.0
    %v569 = vmax.f32 %v568, -1.0
    %v570 = vmul.f32 %v304, %v304
    %v571 = vmin.f32 16.0, %v570
    %v572 = vmul.f32 %v571, 2.1237322e-06
    %v573 = vadd.f32 %v572, 0.00028619796
    %v574 = vmul.f32 %v571, %v573
    %v575 = vadd.f32 %v574, 0.0036580483
    %v576 = vmul.f32 %v571, %v575
    %v577 = vadd.f32 %v576, 0.05243302
    %v578 = vmul.f32 %v571, %v577
    %v579 = vadd.f32 %v578, 0.18741608
    %v580 = vmul.f32 %v571, %v579
    %v581 = vadd.f32 %v580, 1.1283791
    %v582 = vmul.f32 %v304, %v581
    %v583 = vmul.f32 %v571, 3.8918573e-05
    %v584 = vadd.f32 %v583, 0.001143296
    %v585 = vmul.f32 %v571, %v584
    %v586 = vadd.f32 %v585, 0.014752088
    %v587 = vmul.f32 %v571, %v586
    %v588 = vadd.f32 %v587, 0.112945676
    %v589 = vmul.f32 %v571, %v588
    %v590 = vadd.f32 %v589, 0.4994258
    %v591 = vmul.f32 %v571, %v590
    %v592 = vadd.f32 %v591, 1.0
    %v593 = vrcp.pop %v592
    %v594 = vmul.f32 %v592, %v593
    %v595 = vsub.f32 1.0, %v594
    %v596 = vmul.f32 %v593, %v595
    %v597 = vadd.f32 %v593, %v596
    %vm598 = vweird.f32 %v592
    %vm599 = vweird.f32 %v593
    %vm600 = vmor %vm598, %vm599
    %v601 = vsel %vm600, %v593, %v597
    %v602 = vand.u32 2147483647, %v592
    %vm603 = vcmp.eq.f32.partialorder %v602, 8.507059e+37
    %v604 = vand.u32 %v592, 2147483648
    %v605 = vor.u32 1.1754944e-38, %v604
    %v606 = vsel %vm603, %v605, %v601
    %v607 = vmul.f32 %v582, %v606
    %v608 = vmin.f32 %v607, 1.0
    %v609 = vmax.f32 %v608, -1.0
    %v610 = vmul.f32 %v305, %v305
    %v611 = vmin.f32 16.0, %v610
    %v612 = vmul.f32 %v611, 2.1237322e-06
    %v613 = vadd.f32 %v612, 0.00028619796
    %v614 = vmul.f32 %v611, %v613
    %v615 = vadd.f32 %v614, 0.0036580483
    %v616 = vmul.f32 %v611, %v615
    %v617 = vadd.f32 %v616, 0.05243302
    %v618 = vmul.f32 %v611, %v617
    %v619 = vadd.f32 %v618, 0.18741608
    %v620 = vmul.f32 %v611, %v619
    %v621 = vadd.f32 %v620, 1.1283791
    %v622 = vmul.f32 %v305, %v621
    %v623 = vmul.f32 %v611, 3.8918573e-05
    %v624 = vadd.f32 %v623, 0.001143296
    %v625 = vmul.f32 %v611, %v624
    %v626 = vadd.f32 %v625, 0.014752088
    %v627 = vmul.f32 %v611, %v626
    %v628 = vadd.f32 %v627, 0.112945676
    %v629 = vmul.f32 %v611, %v628
    %v630 = vadd.f32 %v629, 0.4994258
    %v631 = vmul.f32 %v611, %v630
    %v632 = vadd.f32 %v631, 1.0
    %v633 = vrcp.pop %v632
    %v634 = vmul.f32 %v632, %v633
    %v635 = vsub.f32 1.0, %v634
    %v636 = vmul.f32 %v633, %v635
    %v637 = vadd.f32 %v633, %v636
    %vm638 = vweird.f32 %v632
    %vm639 = vweird.f32 %v633
    %vm640 = vmor %vm638, %vm639
    %v641 = vsel %vm640, %v633, %v637
    %v642 = vand.u32 2147483647, %v632
    %vm643 = vcmp.eq.f32.partialorder %v642, 8.507059e+37
    %v644 = vand.u32 %v632, 2147483648
    %v645 = vor.u32 1.1754944e-38, %v644
    %v646 = vsel %vm643, %v645, %v641
    %v647 = vmul.f32 %v622, %v646
    %v648 = vmin.f32 %v647, 1.0
    %v649 = vmax.f32 %v648, -1.0
    %v650 = vmul.f32 %v306, %v306
    %v651 = vmin.f32 16.0, %v650
    %v652 = vmul.f32 %v651, 2.1237322e-06
    %v653 = vadd.f32 %v652, 0.00028619796
    %v654 = vmul.f32 %v651, %v653
    %v655 = vadd.f32 %v654, 0.0036580483
    %v656 = vmul.f32 %v651, %v655
    %v657 = vadd.f32 %v656, 0.05243302
    %v658 = vmul.f32 %v651, %v657
    %v659 = vadd.f32 %v658, 0.18741608
    %v660 = vmul.f32 %v651, %v659
    %v661 = vadd.f32 %v660, 1.1283791
    %v662 = vmul.f32 %v306, %v661
    %v663 = vmul.f32 %v651, 3.8918573e-05
    %v664 = vadd.f32 %v663, 0.001143296
    %v665 = vmul.f32 %v651, %v664
    %v666 = vadd.f32 %v665, 0.014752088
    %v667 = vmul.f32 %v651, %v666
    %v668 = vadd.f32 %v667, 0.112945676
    %v669 = vmul.f32 %v651, %v668
    %v670 = vadd.f32 %v669, 0.4994258
    %v671 = vmul.f32 %v651, %v670
    %v672 = vadd.f32 %v671, 1.0
    %v673 = vrcp.pop %v672
    %v674 = vmul.f32 %v672, %v673
    %v675 = vsub.f32 1.0, %v674
    %v676 = vmul.f32 %v673, %v675
    %v677 = vadd.f32 %v673, %v676
    %vm678 = vweird.f32 %v672
    %vm679 = vweird.f32 %v673
    %vm680 = vmor %vm678, %vm679
    %v681 = vsel %vm680, %v673, %v677
    %v682 = vand.u32 2147483647, %v672
    %vm683 = vcmp.eq.f32.partialorder %v682, 8.507059e+37
    %v684 = vand.u32 %v672, 2147483648
    %v685 = vor.u32 1.1754944e-38, %v684
    %v686 = vsel %vm683, %v685, %v681
    %v687 = vmul.f32 %v662, %v686
    %v688 = vmin.f32 %v687, 1.0
    %v689 = vmax.f32 %v688, -1.0
    %v690 = vmul.f32 %v307, %v307
    %v691 = vmin.f32 16.0, %v690
    %v692 = vmul.f32 %v691, 2.1237322e-06
    %v693 = vadd.f32 %v692, 0.00028619796
    %v694 = vmul.f32 %v691, %v693
    %v695 = vadd.f32 %v694, 0.0036580483
    %v696 = vmul.f32 %v691, %v695
    %v697 = vadd.f32 %v696, 0.05243302
    %v698 = vmul.f32 %v691, %v697
    %v699 = vadd.f32 %v698, 0.18741608
    %v700 = vmul.f32 %v691, %v699
    %v701 = vadd.f32 %v700, 1.1283791
    %v702 = vmul.f32 %v307, %v701
    %v703 = vmul.f32 %v691, 3.8918573e-05
    %v704 = vadd.f32 %v703, 0.001143296
    %v705 = vmul.f32 %v691, %v704
    %v706 = vadd.f32 %v705, 0.014752088
    %v707 = vmul.f32 %v691, %v706
    %v708 = vadd.f32 %v707, 0.112945676
    %v709 = vmul.f32 %v691, %v708
    %v710 = vadd.f32 %v709, 0.4994258
    %v711 = vmul.f32 %v691, %v710
    %v712 = vadd.f32 %v711, 1.0
    %v713 = vrcp.pop %v712
    %v714 = vmul.f32 %v712, %v713
    %v715 = vsub.f32 1.0, %v714
    %v716 = vmul.f32 %v713, %v715
    %v717 = vadd.f32 %v713, %v716
    %vm718 = vweird.f32 %v712
    %vm719 = vweird.f32 %v713
    %vm720 = vmor %vm718, %vm719
    %v721 = vsel %vm720, %v713, %v717
    %v722 = vand.u32 2147483647, %v712
    %vm723 = vcmp.eq.f32.partialorder %v722, 8.507059e+37
    %v724 = vand.u32 %v712, 2147483648
    %v725 = vor.u32 1.1754944e-38, %v724
    %v726 = vsel %vm723, %v725, %v721
    %v727 = vmul.f32 %v702, %v726
    %v728 = vmin.f32 %v727, 1.0
    %v729 = vmax.f32 %v728, -1.0
    %v730 = vmul.f32 %v308, %v308
    %v731 = vmin.f32 16.0, %v730
    %v732 = vmul.f32 %v731, 2.1237322e-06
    %v733 = vadd.f32 %v732, 0.00028619796
    %v734 = vmul.f32 %v731, %v733
    %v735 = vadd.f32 %v734, 0.0036580483
    %v736 = vmul.f32 %v731, %v735
    %v737 = vadd.f32 %v736, 0.05243302
    %v738 = vmul.f32 %v731, %v737
    %v739 = vadd.f32 %v738, 0.18741608
    %v740 = vmul.f32 %v731, %v739
    %v741 = vadd.f32 %v740, 1.1283791
    %v742 = vmul.f32 %v308, %v741
    %v743 = vmul.f32 %v731, 3.8918573e-05
    %v744 = vadd.f32 %v743, 0.001143296
    %v745 = vmul.f32 %v731, %v744
    %v746 = vadd.f32 %v745, 0.014752088
    %v747 = vmul.f32 %v731, %v746
    %v748 = vadd.f32 %v747, 0.112945676
    %v749 = vmul.f32 %v731, %v748
    %v750 = vadd.f32 %v749, 0.4994258
    %v751 = vmul.f32 %v731, %v750
    %v752 = vadd.f32 %v751, 1.0
    %v753 = vrcp.pop %v752
    %v754 = vmul.f32 %v752, %v753
    %v755 = vsub.f32 1.0, %v754
    %v756 = vmul.f32 %v753, %v755
    %v757 = vadd.f32 %v753, %v756
    %vm758 = vweird.f32 %v752
    %vm759 = vweird.f32 %v753
    %vm760 = vmor %vm758, %vm759
    %v761 = vsel %vm760, %v753, %v757
    %v762 = vand.u32 2147483647, %v752
    %vm763 = vcmp.eq.f32.partialorder %v762, 8.507059e+37
    %v764 = vand.u32 %v752, 2147483648
    %v765 = vor.u32 1.1754944e-38, %v764
    %v766 = vsel %vm763, %v765, %v761
    %v767 = vmul.f32 %v742, %v766
    %v768 = vmin.f32 %v767, 1.0
    %v769 = vmax.f32 %v768, -1.0
    %v770 = vmul.f32 %v309, %v309
    %v771 = vmin.f32 16.0, %v770
    %v772 = vmul.f32 %v771, 2.1237322e-06
    %v773 = vadd.f32 %v772, 0.00028619796
    %v774 = vmul.f32 %v771, %v773
    %v775 = vadd.f32 %v774, 0.0036580483
    %v776 = vmul.f32 %v771, %v775
    %v777 = vadd.f32 %v776, 0.05243302
    %v778 = vmul.f32 %v771, %v777
    %v779 = vadd.f32 %v778, 0.18741608
    %v780 = vmul.f32 %v771, %v779
    %v781 = vadd.f32 %v780, 1.1283791
    %v782 = vmul.f32 %v309, %v781
    %v783 = vmul.f32 %v771, 3.8918573e-05
    %v784 = vadd.f32 %v783, 0.001143296
    %v785 = vmul.f32 %v771, %v784
    %v786 = vadd.f32 %v785, 0.014752088
    %v787 = vmul.f32 %v771, %v786
    %v788 = vadd.f32 %v787, 0.112945676
    %v789 = vmul.f32 %v771, %v788
    %v790 = vadd.f32 %v789, 0.4994258
    %v791 = vmul.f32 %v771, %v790
    %v792 = vadd.f32 %v791, 1.0
    %v793 = vrcp.pop %v792
    %v794 = vmul.f32 %v792, %v793
    %v795 = vsub.f32 1.0, %v794
    %v796 = vmul.f32 %v793, %v795
    %v797 = vadd.f32 %v793, %v796
    %vm798 = vweird.f32 %v792
    %vm799 = vweird.f32 %v793
    %vm800 = vmor %vm798, %vm799
    %v801 = vsel %vm800, %v793, %v797
    %v802 = vand.u32 2147483647, %v792
    %vm803 = vcmp.eq.f32.partialorder %v802, 8.507059e+37
    %v804 = vand.u32 %v792, 2147483648
    %v805 = vor.u32 1.1754944e-38, %v804
    %v806 = vsel %vm803, %v805, %v801
    %v807 = vmul.f32 %v782, %v806
    %v808 = vmin.f32 %v807, 1.0
    %v809 = vmax.f32 %v808, -1.0
    %v810 = vmul.f32 %v310, %v310
    %v811 = vmin.f32 16.0, %v810
    %v812 = vmul.f32 %v811, 2.1237322e-06
    %v813 = vadd.f32 %v812, 0.00028619796
    %v814 = vmul.f32 %v811, %v813
    %v815 = vadd.f32 %v814, 0.0036580483
    %v816 = vmul.f32 %v811, %v815
    %v817 = vadd.f32 %v816, 0.05243302
    %v818 = vmul.f32 %v811, %v817
    %v819 = vadd.f32 %v818, 0.18741608
    %v820 = vmul.f32 %v811, %v819
    %v821 = vadd.f32 %v820, 1.1283791
    %v822 = vmul.f32 %v310, %v821
    %v823 = vmul.f32 %v811, 3.8918573e-05
    %v824 = vadd.f32 %v823, 0.001143296
    %v825 = vmul.f32 %v811, %v824
    %v826 = vadd.f32 %v825, 0.014752088
    %v827 = vmul.f32 %v811, %v826
    %v828 = vadd.f32 %v827, 0.112945676
    %v829 = vmul.f32 %v811, %v828
    %v830 = vadd.f32 %v829, 0.4994258
    %v831 = vmul.f32 %v811, %v830
    %v832 = vadd.f32 %v831, 1.0
    %v833 = vrcp.pop %v832
    %v834 = vmul.f32 %v832, %v833
    %v835 = vsub.f32 1.0, %v834
    %v836 = vmul.f32 %v833, %v835
    %v837 = vadd.f32 %v833, %v836
    %vm838 = vweird.f32 %v832
    %vm839 = vweird.f32 %v833
    %vm840 = vmor %vm838, %vm839
    %v841 = vsel %vm840, %v833, %v837
    %v842 = vand.u32 2147483647, %v832
    %vm843 = vcmp.eq.f32.partialorder %v842, 8.507059e+37
    %v844 = vand.u32 %v832, 2147483648
    %v845 = vor.u32 1.1754944e-38, %v844
    %v846 = vsel %vm843, %v845, %v841
    %v847 = vmul.f32 %v822, %v846
    %v848 = vmin.f32 %v847, 1.0
    %v849 = vmax.f32 %v848, -1.0
    %v850 = vmul.f32 %v311, %v311
    %v851 = vmin.f32 16.0, %v850
    %v852 = vmul.f32 %v851, 2.1237322e-06
    %v853 = vadd.f32 %v852, 0.00028619796
    %v854 = vmul.f32 %v851, %v853
    %v855 = vadd.f32 %v854, 0.0036580483
    %v856 = vmul.f32 %v851, %v855
    %v857 = vadd.f32 %v856, 0.05243302
    %v858 = vmul.f32 %v851, %v857
    %v859 = vadd.f32 %v858, 0.18741608
    %v860 = vmul.f32 %v851, %v859
    %v861 = vadd.f32 %v860, 1.1283791
    %v862 = vmul.f32 %v311, %v861
    %v863 = vmul.f32 %v851, 3.8918573e-05
    %v864 = vadd.f32 %v863, 0.001143296
    %v865 = vmul.f32 %v851, %v864
    %v866 = vadd.f32 %v865, 0.014752088
    %v867 = vmul.f32 %v851, %v866
    %v868 = vadd.f32 %v867, 0.112945676
    %v869 = vmul.f32 %v851, %v868
    %v870 = vadd.f32 %v869, 0.4994258
    %v871 = vmul.f32 %v851, %v870
    %v872 = vadd.f32 %v871, 1.0
    %v873 = vrcp.pop %v872
    %v874 = vmul.f32 %v872, %v873
    %v875 = vsub.f32 1.0, %v874
    %v876 = vmul.f32 %v873, %v875
    %v877 = vadd.f32 %v873, %v876
    %vm878 = vweird.f32 %v872
    %vm879 = vweird.f32 %v873
    %vm880 = vmor %vm878, %vm879
    %v881 = vsel %vm880, %v873, %v877
    %v882 = vand.u32 2147483647, %v872
    %vm883 = vcmp.eq.f32.partialorder %v882, 8.507059e+37
    %v884 = vand.u32 %v872, 2147483648
    %v885 = vor.u32 1.1754944e-38, %v884
    %v886 = vsel %vm883, %v885, %v881
    %v887 = vmul.f32 %v862, %v886
    %v888 = vmin.f32 %v887, 1.0
    %v889 = vmax.f32 %v888, -1.0
    %v890 = vmul.f32 %v312, %v312
    %v891 = vmin.f32 16.0, %v890
    %v892 = vmul.f32 %v891, 2.1237322e-06
    %v893 = vadd.f32 %v892, 0.00028619796
    %v894 = vmul.f32 %v891, %v893
    %v895 = vadd.f32 %v894, 0.0036580483
    %v896 = vmul.f32 %v891, %v895
    %v897 = vadd.f32 %v896, 0.05243302
    %v898 = vmul.f32 %v891, %v897
    %v899 = vadd.f32 %v898, 0.18741608
    %v900 = vmul.f32 %v891, %v899
    %v901 = vadd.f32 %v900, 1.1283791
    %v902 = vmul.f32 %v312, %v901
    %v903 = vmul.f32 %v891, 3.8918573e-05
    %v904 = vadd.f32 %v903, 0.001143296
    %v905 = vmul.f32 %v891, %v904
    %v906 = vadd.f32 %v905, 0.014752088
    %v907 = vmul.f32 %v891, %v906
    %v908 = vadd.f32 %v907, 0.112945676
    %v909 = vmul.f32 %v891, %v908
    %v910 = vadd.f32 %v909, 0.4994258
    %v911 = vmul.f32 %v891, %v910
    %v912 = vadd.f32 %v911, 1.0
    %v913 = vrcp.pop %v912
    %v914 = vmul.f32 %v912, %v913
    %v915 = vsub.f32 1.0, %v914
    %v916 = vmul.f32 %v913, %v915
    %v917 = vadd.f32 %v913, %v916
    %vm918 = vweird.f32 %v912
    %vm919 = vweird.f32 %v913
    %vm920 = vmor %vm918, %vm919
    %v921 = vsel %vm920, %v913, %v917
    %v922 = vand.u32 2147483647, %v912
    %vm923 = vcmp.eq.f32.partialorder %v922, 8.507059e+37
    %v924 = vand.u32 %v912, 2147483648
    %v925 = vor.u32 1.1754944e-38, %v924
    %v926 = vsel %vm923, %v925, %v921
    %v927 = vmul.f32 %v902, %v926
    %v928 = vmin.f32 %v927, 1.0
    %v929 = vmax.f32 %v928, -1.0
    %v930 = vmul.f32 %v313, %v313
    %v931 = vmin.f32 16.0, %v930
    %v932 = vmul.f32 %v931, 2.1237322e-06
    %v933 = vadd.f32 %v932, 0.00028619796
    %v934 = vmul.f32 %v931, %v933
    %v935 = vadd.f32 %v934, 0.0036580483
    %v936 = vmul.f32 %v931, %v935
    %v937 = vadd.f32 %v936, 0.05243302
    %v938 = vmul.f32 %v931, %v937
    %v939 = vadd.f32 %v938, 0.18741608
    %v940 = vmul.f32 %v931, %v939
    %v941 = vadd.f32 %v940, 1.1283791
    %v942 = vmul.f32 %v313, %v941
    %v943 = vmul.f32 %v931, 3.8918573e-05
    %v944 = vadd.f32 %v943, 0.001143296
    %v945 = vmul.f32 %v931, %v944
    %v946 = vadd.f32 %v945, 0.014752088
    %v947 = vmul.f32 %v931, %v946
    %v948 = vadd.f32 %v947, 0.112945676
    %v949 = vmul.f32 %v931, %v948
    %v950 = vadd.f32 %v949, 0.4994258
    %v951 = vmul.f32 %v931, %v950
    %v952 = vadd.f32 %v951, 1.0
    %v953 = vrcp.pop %v952
    %v954 = vmul.f32 %v952, %v953
    %v955 = vsub.f32 1.0, %v954
    %v956 = vmul.f32 %v953, %v955
    %v957 = vadd.f32 %v953, %v956
    %vm958 = vweird.f32 %v952
    %vm959 = vweird.f32 %v953
    %vm960 = vmor %vm958, %vm959
    %v961 = vsel %vm960, %v953, %v957
    %v962 = vand.u32 2147483647, %v952
    %vm963 = vcmp.eq.f32.partialorder %v962, 8.507059e+37
    %v964 = vand.u32 %v952, 2147483648
    %v965 = vor.u32 1.1754944e-38, %v964
    %v966 = vsel %vm963, %v965, %v961
    %v967 = vmul.f32 %v942, %v966
    %v968 = vmin.f32 %v967, 1.0
    %v969 = vmax.f32 %v968, -1.0
    %v970 = vmul.f32 %v314, %v314
    %v971 = vmin.f32 16.0, %v970
    %v972 = vmul.f32 %v971, 2.1237322e-06
    %v973 = vadd.f32 %v972, 0.00028619796
    %v974 = vmul.f32 %v971, %v973
    %v975 = vadd.f32 %v974, 0.0036580483
    %v976 = vmul.f32 %v971, %v975
    %v977 = vadd.f32 %v976, 0.05243302
    %v978 = vmul.f32 %v971, %v977
    %v979 = vadd.f32 %v978, 0.18741608
    %v980 = vmul.f32 %v971, %v979
    %v981 = vadd.f32 %v980, 1.1283791
    %v982 = vmul.f32 %v314, %v981
    %v983 = vmul.f32 %v971, 3.8918573e-05
    %v984 = vadd.f32 %v983, 0.001143296
    %v985 = vmul.f32 %v971, %v984
    %v986 = vadd.f32 %v985, 0.014752088
    %v987 = vmul.f32 %v971, %v986
    %v988 = vadd.f32 %v987, 0.112945676
    %v989 = vmul.f32 %v971, %v988
    %v990 = vadd.f32 %v989, 0.4994258
    %v991 = vmul.f32 %v971, %v990
    %v992 = vadd.f32 %v991, 1.0
    %v993 = vrcp.pop %v992
    %v994 = vmul.f32 %v992, %v993
    %v995 = vsub.f32 1.0, %v994
    %v996 = vmul.f32 %v993, %v995
    %v997 = vadd.f32 %v993, %v996
    %vm998 = vweird.f32 %v992
    %vm999 = vweird.f32 %v993
    %vm1000 = vmor %vm998, %vm999
    %v1001 = vsel %vm1000, %v993, %v997
    %v1002 = vand.u32 2147483647, %v992
    %vm1003 = vcmp.eq.f32.partialorder %v1002, 8.507059e+37
    %v1004 = vand.u32 %v992, 2147483648
    %v1005 = vor.u32 1.1754944e-38, %v1004
    %v1006 = vsel %vm1003, %v1005, %v1001
    %v1007 = vmul.f32 %v982, %v1006
    %v1008 = vmin.f32 %v1007, 1.0
    %v1009 = vmax.f32 %v1008, -1.0
    %v1010 = vmul.f32 %v315, %v315
    %v1011 = vmin.f32 16.0, %v1010
    %v1012 = vmul.f32 %v1011, 2.1237322e-06
    %v1013 = vadd.f32 %v1012, 0.00028619796
    %v1014 = vmul.f32 %v1011, %v1013
    %v1015 = vadd.f32 %v1014, 0.0036580483
    %v1016 = vmul.f32 %v1011, %v1015
    %v1017 = vadd.f32 %v1016, 0.05243302
    %v1018 = vmul.f32 %v1011, %v1017
    %v1019 = vadd.f32 %v1018, 0.18741608
    %v1020 = vmul.f32 %v1011, %v1019
    %v1021 = vadd.f32 %v1020, 1.1283791
    %v1022 = vmul.f32 %v315, %v1021
    %v1023 = vmul.f32 %v1011, 3.8918573e-05
    %v1024 = vadd.f32 %v1023, 0.001143296
    %v1025 = vmul.f32 %v1011, %v1024
    %v1026 = vadd.f32 %v1025, 0.014752088
    %v1027 = vmul.f32 %v1011, %v1026
    %v1028 = vadd.f32 %v1027, 0.112945676
    %v1029 = vmul.f32 %v1011, %v1028
    %v1030 = vadd.f32 %v1029, 0.4994258
    %v1031 = vmul.f32 %v1011, %v1030
    %v1032 = vadd.f32 %v1031, 1.0
    %v1033 = vrcp.pop %v1032
    %v1034 = vmul.f32 %v1032, %v1033
    %v1035 = vsub.f32 1.0, %v1034
    %v1036 = vmul.f32 %v1033, %v1035
    %v1037 = vadd.f32 %v1033, %v1036
    %vm1038 = vweird.f32 %v1032
    %vm1039 = vweird.f32 %v1033
    %vm1040 = vmor %vm1038, %vm1039
    %v1041 = vsel %vm1040, %v1033, %v1037
    %v1042 = vand.u32 2147483647, %v1032
    %vm1043 = vcmp.eq.f32.partialorder %v1042, 8.507059e+37
    %v1044 = vand.u32 %v1032, 2147483648
    %v1045 = vor.u32 1.1754944e-38, %v1044
    %v1046 = vsel %vm1043, %v1045, %v1041
    %v1047 = vmul.f32 %v1022, %v1046
    %v1048 = vmin.f32 %v1047, 1.0
    %v1049 = vmax.f32 %v1048, -1.0
    %v1050 = vmul.f32 %v316, %v316
    %v1051 = vmin.f32 16.0, %v1050
    %v1052 = vmul.f32 %v1051, 2.1237322e-06
    %v1053 = vadd.f32 %v1052, 0.00028619796
    %v1054 = vmul.f32 %v1051, %v1053
    %v1055 = vadd.f32 %v1054, 0.0036580483
    %v1056 = vmul.f32 %v1051, %v1055
    %v1057 = vadd.f32 %v1056, 0.05243302
    %v1058 = vmul.f32 %v1051, %v1057
    %v1059 = vadd.f32 %v1058, 0.18741608
    %v1060 = vmul.f32 %v1051, %v1059
    %v1061 = vadd.f32 %v1060, 1.1283791
    %v1062 = vmul.f32 %v316, %v1061
    %v1063 = vmul.f32 %v1051, 3.8918573e-05
    %v1064 = vadd.f32 %v1063, 0.001143296
    %v1065 = vmul.f32 %v1051, %v1064
    %v1066 = vadd.f32 %v1065, 0.014752088
    %v1067 = vmul.f32 %v1051, %v1066
    %v1068 = vadd.f32 %v1067, 0.112945676
    %v1069 = vmul.f32 %v1051, %v1068
    %v1070 = vadd.f32 %v1069, 0.4994258
    %v1071 = vmul.f32 %v1051, %v1070
    %v1072 = vadd.f32 %v1071, 1.0
    %v1073 = vrcp.pop %v1072
    %v1074 = vmul.f32 %v1072, %v1073
    %v1075 = vsub.f32 1.0, %v1074
    %v1076 = vmul.f32 %v1073, %v1075
    %v1077 = vadd.f32 %v1073, %v1076
    %vm1078 = vweird.f32 %v1072
    %vm1079 = vweird.f32 %v1073
    %vm1080 = vmor %vm1078, %vm1079
    %v1081 = vsel %vm1080, %v1073, %v1077
    %v1082 = vand.u32 2147483647, %v1072
    %vm1083 = vcmp.eq.f32.partialorder %v1082, 8.507059e+37
    %v1084 = vand.u32 %v1072, 2147483648
    %v1085 = vor.u32 1.1754944e-38, %v1084
    %v1086 = vsel %vm1083, %v1085, %v1081
    %v1087 = vmul.f32 %v1062, %v1086
    %v1088 = vmin.f32 %v1087, 1.0
    %v1089 = vmax.f32 %v1088, -1.0
    %v1090 = vmul.f32 %v317, %v317
    %v1091 = vmin.f32 16.0, %v1090
    %v1092 = vmul.f32 %v1091, 2.1237322e-06
    %v1093 = vadd.f32 %v1092, 0.00028619796
    %v1094 = vmul.f32 %v1091, %v1093
    %v1095 = vadd.f32 %v1094, 0.0036580483
    %v1096 = vmul.f32 %v1091, %v1095
    %v1097 = vadd.f32 %v1096, 0.05243302
    %v1098 = vmul.f32 %v1091, %v1097
    %v1099 = vadd.f32 %v1098, 0.18741608
    %v1100 = vmul.f32 %v1091, %v1099
    %v1101 = vadd.f32 %v1100, 1.1283791
    %v1102 = vmul.f32 %v317, %v1101
    %v1103 = vmul.f32 %v1091, 3.8918573e-05
    %v1104 = vadd.f32 %v1103, 0.001143296
    %v1105 = vmul.f32 %v1091, %v1104
    %v1106 = vadd.f32 %v1105, 0.014752088
    %v1107 = vmul.f32 %v1091, %v1106
    %v1108 = vadd.f32 %v1107, 0.112945676
    %v1109 = vmul.f32 %v1091, %v1108
    %v1110 = vadd.f32 %v1109, 0.4994258
    %v1111 = vmul.f32 %v1091, %v1110
    %v1112 = vadd.f32 %v1111, 1.0
    %v1113 = vrcp.pop %v1112
    %v1114 = vmul.f32 %v1112, %v1113
    %v1115 = vsub.f32 1.0, %v1114
    %v1116 = vmul.f32 %v1113, %v1115
    %v1117 = vadd.f32 %v1113, %v1116
    %vm1118 = vweird.f32 %v1112
    %vm1119 = vweird.f32 %v1113
    %vm1120 = vmor %vm1118, %vm1119
    %v1121 = vsel %vm1120, %v1113, %v1117
    %v1122 = vand.u32 2147483647, %v1112
    %vm1123 = vcmp.eq.f32.partialorder %v1122, 8.507059e+37
    %v1124 = vand.u32 %v1112, 2147483648
    %v1125 = vor.u32 1.1754944e-38, %v1124
    %v1126 = vsel %vm1123, %v1125, %v1121
    %v1127 = vmul.f32 %v1102, %v1126
    %v1128 = vmin.f32 %v1127, 1.0
    %v1129 = vmax.f32 %v1128, -1.0
    %v1130 = vmul.f32 %v318, %v318
    %v1131 = vmin.f32 16.0, %v1130
    %v1132 = vmul.f32 %v1131, 2.1237322e-06
    %v1133 = vadd.f32 %v1132, 0.00028619796
    %v1134 = vmul.f32 %v1131, %v1133
    %v1135 = vadd.f32 %v1134, 0.0036580483
    %v1136 = vmul.f32 %v1131, %v1135
    %v1137 = vadd.f32 %v1136, 0.05243302
    %v1138 = vmul.f32 %v1131, %v1137
    %v1139 = vadd.f32 %v1138, 0.18741608
    %v1140 = vmul.f32 %v1131, %v1139
    %v1141 = vadd.f32 %v1140, 1.1283791
    %v1142 = vmul.f32 %v318, %v1141
    %v1143 = vmul.f32 %v1131, 3.8918573e-05
    %v1144 = vadd.f32 %v1143, 0.001143296
    %v1145 = vmul.f32 %v1131, %v1144
    %v1146 = vadd.f32 %v1145, 0.014752088
    %v1147 = vmul.f32 %v1131, %v1146
    %v1148 = vadd.f32 %v1147, 0.112945676
    %v1149 = vmul.f32 %v1131, %v1148
    %v1150 = vadd.f32 %v1149, 0.4994258
    %v1151 = vmul.f32 %v1131, %v1150
    %v1152 = vadd.f32 %v1151, 1.0
    %v1153 = vrcp.pop %v1152
    %v1154 = vmul.f32 %v1152, %v1153
    %v1155 = vsub.f32 1.0, %v1154
    %v1156 = vmul.f32 %v1153, %v1155
    %v1157 = vadd.f32 %v1153, %v1156
    %vm1158 = vweird.f32 %v1152
    %vm1159 = vweird.f32 %v1153
    %vm1160 = vmor %vm1158, %vm1159
    %v1161 = vsel %vm1160, %v1153, %v1157
    %v1162 = vand.u32 2147483647, %v1152
    %vm1163 = vcmp.eq.f32.partialorder %v1162, 8.507059e+37
    %v1164 = vand.u32 %v1152, 2147483648
    %v1165 = vor.u32 1.1754944e-38, %v1164
    %v1166 = vsel %vm1163, %v1165, %v1161
    %v1167 = vmul.f32 %v1142, %v1166
    %v1168 = vmin.f32 %v1167, 1.0
    %v1169 = vmax.f32 %v1168, -1.0
    %v1170 = vmul.f32 %v319, %v319
    %v1171 = vmin.f32 16.0, %v1170
    %v1172 = vmul.f32 %v1171, 2.1237322e-06
    %v1173 = vadd.f32 %v1172, 0.00028619796
    %v1174 = vmul.f32 %v1171, %v1173
    %v1175 = vadd.f32 %v1174, 0.0036580483
    %v1176 = vmul.f32 %v1171, %v1175
    %v1177 = vadd.f32 %v1176, 0.05243302
    %v1178 = vmul.f32 %v1171, %v1177
    %v1179 = vadd.f32 %v1178, 0.18741608
    %v1180 = vmul.f32 %v1171, %v1179
    %v1181 = vadd.f32 %v1180, 1.1283791
    %v1182 = vmul.f32 %v319, %v1181
    %v1183 = vmul.f32 %v1171, 3.8918573e-05
    %v1184 = vadd.f32 %v1183, 0.001143296
    %v1185 = vmul.f32 %v1171, %v1184
    %v1186 = vadd.f32 %v1185, 0.014752088
    %v1187 = vmul.f32 %v1171, %v1186
    %v1188 = vadd.f32 %v1187, 0.112945676
    %v1189 = vmul.f32 %v1171, %v1188
    %v1190 = vadd.f32 %v1189, 0.4994258
    %v1191 = vmul.f32 %v1171, %v1190
    %v1192 = vadd.f32 %v1191, 1.0
    %v1193 = vrcp.pop %v1192
    %v1194 = vmul.f32 %v1192, %v1193
    %v1195 = vsub.f32 1.0, %v1194
    %v1196 = vmul.f32 %v1193, %v1195
    %v1197 = vadd.f32 %v1193, %v1196
    %vm1198 = vweird.f32 %v1192
    %vm1199 = vweird.f32 %v1193
    %vm1200 = vmor %vm1198, %vm1199
    %v1201 = vsel %vm1200, %v1193, %v1197
    %v1202 = vand.u32 2147483647, %v1192
    %vm1203 = vcmp.eq.f32.partialorder %v1202, 8.507059e+37
    %v1204 = vand.u32 %v1192, 2147483648
    %v1205 = vor.u32 1.1754944e-38, %v1204
    %v1206 = vsel %vm1203, %v1205, %v1201
    %v1207 = vmul.f32 %v1182, %v1206
    %v1208 = vmin.f32 %v1207, 1.0
    %v1209 = vmax.f32 %v1208, -1.0
    %v1210 = vmul.f32 %v320, %v320
    %v1211 = vmin.f32 16.0, %v1210
    %v1212 = vmul.f32 %v1211, 2.1237322e-06
    %v1213 = vadd.f32 %v1212, 0.00028619796
    %v1214 = vmul.f32 %v1211, %v1213
    %v1215 = vadd.f32 %v1214, 0.0036580483
    %v1216 = vmul.f32 %v1211, %v1215
    %v1217 = vadd.f32 %v1216, 0.05243302
    %v1218 = vmul.f32 %v1211, %v1217
    %v1219 = vadd.f32 %v1218, 0.18741608
    %v1220 = vmul.f32 %v1211, %v1219
    %v1221 = vadd.f32 %v1220, 1.1283791
    %v1222 = vmul.f32 %v320, %v1221
    %v1223 = vmul.f32 %v1211, 3.8918573e-05
    %v1224 = vadd.f32 %v1223, 0.001143296
    %v1225 = vmul.f32 %v1211, %v1224
    %v1226 = vadd.f32 %v1225, 0.014752088
    %v1227 = vmul.f32 %v1211, %v1226
    %v1228 = vadd.f32 %v1227, 0.112945676
    %v1229 = vmul.f32 %v1211, %v1228
    %v1230 = vadd.f32 %v1229, 0.4994258
    %v1231 = vmul.f32 %v1211, %v1230
    %v1232 = vadd.f32 %v1231, 1.0
    %v1233 = vrcp.pop %v1232
    %v1234 = vmul.f32 %v1232, %v1233
    %v1235 = vsub.f32 1.0, %v1234
    %v1236 = vmul.f32 %v1233, %v1235
    %v1237 = vadd.f32 %v1233, %v1236
    %vm1238 = vweird.f32 %v1232
    %vm1239 = vweird.f32 %v1233
    %vm1240 = vmor %vm1238, %vm1239
    %v1241 = vsel %vm1240, %v1233, %v1237
    %v1242 = vand.u32 2147483647, %v1232
    %vm1243 = vcmp.eq.f32.partialorder %v1242, 8.507059e+37
    %v1244 = vand.u32 %v1232, 2147483648
    %v1245 = vor.u32 1.1754944e-38, %v1244
    %v1246 = vsel %vm1243, %v1245, %v1241
    %v1247 = vmul.f32 %v1222, %v1246
    %v1248 = vmin.f32 %v1247, 1.0
    %v1249 = vmax.f32 %v1248, -1.0
    %v1250 = vmul.f32 %v321, %v321
    %v1251 = vmin.f32 16.0, %v1250
    %v1252 = vmul.f32 %v1251, 2.1237322e-06
    %v1253 = vadd.f32 %v1252, 0.00028619796
    %v1254 = vmul.f32 %v1251, %v1253
    %v1255 = vadd.f32 %v1254, 0.0036580483
    %v1256 = vmul.f32 %v1251, %v1255
    %v1257 = vadd.f32 %v1256, 0.05243302
    %v1258 = vmul.f32 %v1251, %v1257
    %v1259 = vadd.f32 %v1258, 0.18741608
    %v1260 = vmul.f32 %v1251, %v1259
    %v1261 = vadd.f32 %v1260, 1.1283791
    %v1262 = vmul.f32 %v321, %v1261
    %v1263 = vmul.f32 %v1251, 3.8918573e-05
    %v1264 = vadd.f32 %v1263, 0.001143296
    %v1265 = vmul.f32 %v1251, %v1264
    %v1266 = vadd.f32 %v1265, 0.014752088
    %v1267 = vmul.f32 %v1251, %v1266
    %v1268 = vadd.f32 %v1267, 0.112945676
    %v1269 = vmul.f32 %v1251, %v1268
    %v1270 = vadd.f32 %v1269, 0.4994258
    %v1271 = vmul.f32 %v1251, %v1270
    %v1272 = vadd.f32 %v1271, 1.0
    %v1273 = vrcp.pop %v1272
    %v1274 = vmul.f32 %v1272, %v1273
    %v1275 = vsub.f32 1.0, %v1274
    %v1276 = vmul.f32 %v1273, %v1275
    %v1277 = vadd.f32 %v1273, %v1276
    %vm1278 = vweird.f32 %v1272
    %vm1279 = vweird.f32 %v1273
    %vm1280 = vmor %vm1278, %vm1279
    %v1281 = vsel %vm1280, %v1273, %v1277
    %v1282 = vand.u32 2147483647, %v1272
    %vm1283 = vcmp.eq.f32.partialorder %v1282, 8.507059e+37
    %v1284 = vand.u32 %v1272, 2147483648
    %v1285 = vor.u32 1.1754944e-38, %v1284
    %v1286 = vsel %vm1283, %v1285, %v1281
    %v1287 = vmul.f32 %v1262, %v1286
    %v1288 = vmin.f32 %v1287, 1.0
    %v1289 = vmax.f32 %v1288, -1.0
    %v1290 = vmul.f32 %v322, %v322
    %v1291 = vmin.f32 16.0, %v1290
    %v1292 = vmul.f32 %v1291, 2.1237322e-06
    %v1293 = vadd.f32 %v1292, 0.00028619796
    %v1294 = vmul.f32 %v1291, %v1293
    %v1295 = vadd.f32 %v1294, 0.0036580483
    %v1296 = vmul.f32 %v1291, %v1295
    %v1297 = vadd.f32 %v1296, 0.05243302
    %v1298 = vmul.f32 %v1291, %v1297
    %v1299 = vadd.f32 %v1298, 0.18741608
    %v1300 = vmul.f32 %v1291, %v1299
    %v1301 = vadd.f32 %v1300, 1.1283791
    %v1302 = vmul.f32 %v322, %v1301
    %v1303 = vmul.f32 %v1291, 3.8918573e-05
    %v1304 = vadd.f32 %v1303, 0.001143296
    %v1305 = vmul.f32 %v1291, %v1304
    %v1306 = vadd.f32 %v1305, 0.014752088
    %v1307 = vmul.f32 %v1291, %v1306
    %v1308 = vadd.f32 %v1307, 0.112945676
    %v1309 = vmul.f32 %v1291, %v1308
    %v1310 = vadd.f32 %v1309, 0.4994258
    %v1311 = vmul.f32 %v1291, %v1310
    %v1312 = vadd.f32 %v1311, 1.0
    %v1313 = vrcp.pop %v1312
    %v1314 = vmul.f32 %v1312, %v1313
    %v1315 = vsub.f32 1.0, %v1314
    %v1316 = vmul.f32 %v1313, %v1315
    %v1317 = vadd.f32 %v1313, %v1316
    %vm1318 = vweird.f32 %v1312
    %vm1319 = vweird.f32 %v1313
    %vm1320 = vmor %vm1318, %vm1319
    %v1321 = vsel %vm1320, %v1313, %v1317
    %v1322 = vand.u32 2147483647, %v1312
    %vm1323 = vcmp.eq.f32.partialorder %v1322, 8.507059e+37
    %v1324 = vand.u32 %v1312, 2147483648
    %v1325 = vor.u32 1.1754944e-38, %v1324
    %v1326 = vsel %vm1323, %v1325, %v1321
    %v1327 = vmul.f32 %v1302, %v1326
    %v1328 = vmin.f32 %v1327, 1.0
    %v1329 = vmax.f32 %v1328, -1.0
    %v1330 = vmul.f32 %v323, %v323
    %v1331 = vmin.f32 16.0, %v1330
    %v1332 = vmul.f32 %v1331, 2.1237322e-06
    %v1333 = vadd.f32 %v1332, 0.00028619796
    %v1334 = vmul.f32 %v1331, %v1333
    %v1335 = vadd.f32 %v1334, 0.0036580483
    %v1336 = vmul.f32 %v1331, %v1335
    %v1337 = vadd.f32 %v1336, 0.05243302
    %v1338 = vmul.f32 %v1331, %v1337
    %v1339 = vadd.f32 %v1338, 0.18741608
    %v1340 = vmul.f32 %v1331, %v1339
    %v1341 = vadd.f32 %v1340, 1.1283791
    %v1342 = vmul.f32 %v323, %v1341
    %v1343 = vmul.f32 %v1331, 3.8918573e-05
    %v1344 = vadd.f32 %v1343, 0.001143296
    %v1345 = vmul.f32 %v1331, %v1344
    %v1346 = vadd.f32 %v1345, 0.014752088
    %v1347 = vmul.f32 %v1331, %v1346
    %v1348 = vadd.f32 %v1347, 0.112945676
    %v1349 = vmul.f32 %v1331, %v1348
    %v1350 = vadd.f32 %v1349, 0.4994258
    %v1351 = vmul.f32 %v1331, %v1350
    %v1352 = vadd.f32 %v1351, 1.0
    %v1353 = vrcp.pop %v1352
    %v1354 = vmul.f32 %v1352, %v1353
    %v1355 = vsub.f32 1.0, %v1354
    %v1356 = vmul.f32 %v1353, %v1355
    %v1357 = vadd.f32 %v1353, %v1356
    %vm1358 = vweird.f32 %v1352
    %vm1359 = vweird.f32 %v1353
    %vm1360 = vmor %vm1358, %vm1359
    %v1361 = vsel %vm1360, %v1353, %v1357
    %v1362 = vand.u32 2147483647, %v1352
    %vm1363 = vcmp.eq.f32.partialorder %v1362, 8.507059e+37
    %v1364 = vand.u32 %v1352, 2147483648
    %v1365 = vor.u32 1.1754944e-38, %v1364
    %v1366 = vsel %vm1363, %v1365, %v1361
    %v1367 = vmul.f32 %v1342, %v1366
    %v1368 = vmin.f32 %v1367, 1.0
    %v1369 = vmax.f32 %v1368, -1.0
    %v1370 = vmul.f32 %v324, %v324
    %v1371 = vmin.f32 16.0, %v1370
    %v1372 = vmul.f32 %v1371, 2.1237322e-06
    %v1373 = vadd.f32 %v1372, 0.00028619796
    %v1374 = vmul.f32 %v1371, %v1373
    %v1375 = vadd.f32 %v1374, 0.0036580483
    %v1376 = vmul.f32 %v1371, %v1375
    %v1377 = vadd.f32 %v1376, 0.05243302
    %v1378 = vmul.f32 %v1371, %v1377
    %v1379 = vadd.f32 %v1378, 0.18741608
    %v1380 = vmul.f32 %v1371, %v1379
    %v1381 = vadd.f32 %v1380, 1.1283791
    %v1382 = vmul.f32 %v324, %v1381
    %v1383 = vmul.f32 %v1371, 3.8918573e-05
    %v1384 = vadd.f32 %v1383, 0.001143296
    %v1385 = vmul.f32 %v1371, %v1384
    %v1386 = vadd.f32 %v1385, 0.014752088
    %v1387 = vmul.f32 %v1371, %v1386
    %v1388 = vadd.f32 %v1387, 0.112945676
    %v1389 = vmul.f32 %v1371, %v1388
    %v1390 = vadd.f32 %v1389, 0.4994258
    %v1391 = vmul.f32 %v1371, %v1390
    %v1392 = vadd.f32 %v1391, 1.0
    %v1393 = vrcp.pop %v1392
    %v1394 = vmul.f32 %v1392, %v1393
    %v1395 = vsub.f32 1.0, %v1394
    %v1396 = vmul.f32 %v1393, %v1395
    %v1397 = vadd.f32 %v1393, %v1396
    %vm1398 = vweird.f32 %v1392
    %vm1399 = vweird.f32 %v1393
    %vm1400 = vmor %vm1398, %vm1399
    %v1401 = vsel %vm1400, %v1393, %v1397
    %v1402 = vand.u32 2147483647, %v1392
    %vm1403 = vcmp.eq.f32.partialorder %v1402, 8.507059e+37
    %v1404 = vand.u32 %v1392, 2147483648
    %v1405 = vor.u32 1.1754944e-38, %v1404
    %v1406 = vsel %vm1403, %v1405, %v1401
    %v1407 = vmul.f32 %v1382, %v1406
    %v1408 = vmin.f32 %v1407, 1.0
    %v1409 = vmax.f32 %v1408, -1.0
    %v1410 = vmul.f32 %v325, %v325
    %v1411 = vmin.f32 16.0, %v1410
    %v1412 = vmul.f32 %v1411, 2.1237322e-06
    %v1413 = vadd.f32 %v1412, 0.00028619796
    %v1414 = vmul.f32 %v1411, %v1413
    %v1415 = vadd.f32 %v1414, 0.0036580483
    %v1416 = vmul.f32 %v1411, %v1415
    %v1417 = vadd.f32 %v1416, 0.05243302
    %v1418 = vmul.f32 %v1411, %v1417
    %v1419 = vadd.f32 %v1418, 0.18741608
    %v1420 = vmul.f32 %v1411, %v1419
    %v1421 = vadd.f32 %v1420, 1.1283791
    %v1422 = vmul.f32 %v325, %v1421
    %v1423 = vmul.f32 %v1411, 3.8918573e-05
    %v1424 = vadd.f32 %v1423, 0.001143296
    %v1425 = vmul.f32 %v1411, %v1424
    %v1426 = vadd.f32 %v1425, 0.014752088
    %v1427 = vmul.f32 %v1411, %v1426
    %v1428 = vadd.f32 %v1427, 0.112945676
    %v1429 = vmul.f32 %v1411, %v1428
    %v1430 = vadd.f32 %v1429, 0.4994258
    %v1431 = vmul.f32 %v1411, %v1430
    %v1432 = vadd.f32 %v1431, 1.0
    %v1433 = vrcp.pop %v1432
    %v1434 = vmul.f32 %v1432, %v1433
    %v1435 = vsub.f32 1.0, %v1434
    %v1436 = vmul.f32 %v1433, %v1435
    %v1437 = vadd.f32 %v1433, %v1436
    %vm1438 = vweird.f32 %v1432
    %vm1439 = vweird.f32 %v1433
    %vm1440 = vmor %vm1438, %vm1439
    %v1441 = vsel %vm1440, %v1433, %v1437
    %v1442 = vand.u32 2147483647, %v1432
    %vm1443 = vcmp.eq.f32.partialorder %v1442, 8.507059e+37
    %v1444 = vand.u32 %v1432, 2147483648
    %v1445 = vor.u32 1.1754944e-38, %v1444
    %v1446 = vsel %vm1443, %v1445, %v1441
    %v1447 = vmul.f32 %v1422, %v1446
    %v1448 = vmin.f32 %v1447, 1.0
    %v1449 = vmax.f32 %v1448, -1.0
    %v1450 = vmul.f32 %v326, %v326
    %v1451 = vmin.f32 16.0, %v1450
    %v1452 = vmul.f32 %v1451, 2.1237322e-06
    %v1453 = vadd.f32 %v1452, 0.00028619796
    %v1454 = vmul.f32 %v1451, %v1453
    %v1455 = vadd.f32 %v1454, 0.0036580483
    %v1456 = vmul.f32 %v1451, %v1455
    %v1457 = vadd.f32 %v1456, 0.05243302
    %v1458 = vmul.f32 %v1451, %v1457
    %v1459 = vadd.f32 %v1458, 0.18741608
    %v1460 = vmul.f32 %v1451, %v1459
    %v1461 = vadd.f32 %v1460, 1.1283791
    %v1462 = vmul.f32 %v326, %v1461
    %v1463 = vmul.f32 %v1451, 3.8918573e-05
    %v1464 = vadd.f32 %v1463, 0.001143296
    %v1465 = vmul.f32 %v1451, %v1464
    %v1466 = vadd.f32 %v1465, 0.014752088
    %v1467 = vmul.f32 %v1451, %v1466
    %v1468 = vadd.f32 %v1467, 0.112945676
    %v1469 = vmul.f32 %v1451, %v1468
    %v1470 = vadd.f32 %v1469, 0.4994258
    %v1471 = vmul.f32 %v1451, %v1470
    %v1472 = vadd.f32 %v1471, 1.0
    %v1473 = vrcp.pop %v1472
    %v1474 = vmul.f32 %v1472, %v1473
    %v1475 = vsub.f32 1.0, %v1474
    %v1476 = vmul.f32 %v1473, %v1475
    %v1477 = vadd.f32 %v1473, %v1476
    %vm1478 = vweird.f32 %v1472
    %vm1479 = vweird.f32 %v1473
    %vm1480 = vmor %vm1478, %vm1479
    %v1481 = vsel %vm1480, %v1473, %v1477
    %v1482 = vand.u32 2147483647, %v1472
    %vm1483 = vcmp.eq.f32.partialorder %v1482, 8.507059e+37
    %v1484 = vand.u32 %v1472, 2147483648
    %v1485 = vor.u32 1.1754944e-38, %v1484
    %v1486 = vsel %vm1483, %v1485, %v1481
    %v1487 = vmul.f32 %v1462, %v1486
    %v1488 = vmin.f32 %v1487, 1.0
    %v1489 = vmax.f32 %v1488, -1.0
    %v1490 = vmul.f32 %v327, %v327
    %v1491 = vmin.f32 16.0, %v1490
    %v1492 = vmul.f32 %v1491, 2.1237322e-06
    %v1493 = vadd.f32 %v1492, 0.00028619796
    %v1494 = vmul.f32 %v1491, %v1493
    %v1495 = vadd.f32 %v1494, 0.0036580483
    %v1496 = vmul.f32 %v1491, %v1495
    %v1497 = vadd.f32 %v1496, 0.05243302
    %v1498 = vmul.f32 %v1491, %v1497
    %v1499 = vadd.f32 %v1498, 0.18741608
    %v1500 = vmul.f32 %v1491, %v1499
    %v1501 = vadd.f32 %v1500, 1.1283791
    %v1502 = vmul.f32 %v327, %v1501
    %v1503 = vmul.f32 %v1491, 3.8918573e-05
    %v1504 = vadd.f32 %v1503, 0.001143296
    %v1505 = vmul.f32 %v1491, %v1504
    %v1506 = vadd.f32 %v1505, 0.014752088
    %v1507 = vmul.f32 %v1491, %v1506
    %v1508 = vadd.f32 %v1507, 0.112945676
    %v1509 = vmul.f32 %v1491, %v1508
    %v1510 = vadd.f32 %v1509, 0.4994258
    %v1511 = vmul.f32 %v1491, %v1510
    %v1512 = vadd.f32 %v1511, 1.0
    %v1513 = vrcp.pop %v1512
    %v1514 = vmul.f32 %v1512, %v1513
    %v1515 = vsub.f32 1.0, %v1514
    %v1516 = vmul.f32 %v1513, %v1515
    %v1517 = vadd.f32 %v1513, %v1516
    %vm1518 = vweird.f32 %v1512
    %vm1519 = vweird.f32 %v1513
    %vm1520 = vmor %vm1518, %vm1519
    %v1521 = vsel %vm1520, %v1513, %v1517
    %v1522 = vand.u32 2147483647, %v1512
    %vm1523 = vcmp.eq.f32.partialorder %v1522, 8.507059e+37
    %v1524 = vand.u32 %v1512, 2147483648
    %v1525 = vor.u32 1.1754944e-38, %v1524
    %v1526 = vsel %vm1523, %v1525, %v1521
    %v1527 = vmul.f32 %v1502, %v1526
    %v1528 = vmin.f32 %v1527, 1.0
    %v1529 = vmax.f32 %v1528, -1.0
    %v1530 = vmul.f32 %v328, %v328
    %v1531 = vmin.f32 16.0, %v1530
    %v1532 = vmul.f32 %v1531, 2.1237322e-06
    %v1533 = vadd.f32 %v1532, 0.00028619796
    %v1534 = vmul.f32 %v1531, %v1533
    %v1535 = vadd.f32 %v1534, 0.0036580483
    %v1536 = vmul.f32 %v1531, %v1535
    %v1537 = vadd.f32 %v1536, 0.05243302
    %v1538 = vmul.f32 %v1531, %v1537
    %v1539 = vadd.f32 %v1538, 0.18741608
    %v1540 = vmul.f32 %v1531, %v1539
    %v1541 = vadd.f32 %v1540, 1.1283791
    %v1542 = vmul.f32 %v328, %v1541
    %v1543 = vmul.f32 %v1531, 3.8918573e-05
    %v1544 = vadd.f32 %v1543, 0.001143296
    %v1545 = vmul.f32 %v1531, %v1544
    %v1546 = vadd.f32 %v1545, 0.014752088
    %v1547 = vmul.f32 %v1531, %v1546
    %v1548 = vadd.f32 %v1547, 0.112945676
    %v1549 = vmul.f32 %v1531, %v1548
    %v1550 = vadd.f32 %v1549, 0.4994258
    %v1551 = vmul.f32 %v1531, %v1550
    %v1552 = vadd.f32 %v1551, 1.0
    %v1553 = vrcp.pop %v1552
    %v1554 = vmul.f32 %v1552, %v1553
    %v1555 = vsub.f32 1.0, %v1554
    %v1556 = vmul.f32 %v1553, %v1555
    %v1557 = vadd.f32 %v1553, %v1556
    %vm1558 = vweird.f32 %v1552
    %vm1559 = vweird.f32 %v1553
    %vm1560 = vmor %vm1558, %vm1559
    %v1561 = vsel %vm1560, %v1553, %v1557
    %v1562 = vand.u32 2147483647, %v1552
    %vm1563 = vcmp.eq.f32.partialorder %v1562, 8.507059e+37
    %v1564 = vand.u32 %v1552, 2147483648
    %v1565 = vor.u32 1.1754944e-38, %v1564
    %v1566 = vsel %vm1563, %v1565, %v1561
    %v1567 = vmul.f32 %v1542, %v1566
    %v1568 = vmin.f32 %v1567, 1.0
    %v1569 = vmax.f32 %v1568, -1.0
    %v1570 = vmul.f32 %v329, %v329
    %v1571 = vmin.f32 16.0, %v1570
    %v1572 = vmul.f32 %v1571, 2.1237322e-06
    %v1573 = vadd.f32 %v1572, 0.00028619796
    %v1574 = vmul.f32 %v1571, %v1573
    %v1575 = vadd.f32 %v1574, 0.0036580483
    %v1576 = vmul.f32 %v1571, %v1575
    %v1577 = vadd.f32 %v1576, 0.05243302
    %v1578 = vmul.f32 %v1571, %v1577
    %v1579 = vadd.f32 %v1578, 0.18741608
    %v1580 = vmul.f32 %v1571, %v1579
    %v1581 = vadd.f32 %v1580, 1.1283791
    %v1582 = vmul.f32 %v329, %v1581
    %v1583 = vmul.f32 %v1571, 3.8918573e-05
    %v1584 = vadd.f32 %v1583, 0.001143296
    %v1585 = vmul.f32 %v1571, %v1584
    %v1586 = vadd.f32 %v1585, 0.014752088
    %v1587 = vmul.f32 %v1571, %v1586
    %v1588 = vadd.f32 %v1587, 0.112945676
    %v1589 = vmul.f32 %v1571, %v1588
    %v1590 = vadd.f32 %v1589, 0.4994258
    %v1591 = vmul.f32 %v1571, %v1590
    %v1592 = vadd.f32 %v1591, 1.0
    %v1593 = vrcp.pop %v1592
    %v1594 = vmul.f32 %v1592, %v1593
    %v1595 = vsub.f32 1.0, %v1594
    %v1596 = vmul.f32 %v1593, %v1595
    %v1597 = vadd.f32 %v1593, %v1596
    %vm1598 = vweird.f32 %v1592
    %vm1599 = vweird.f32 %v1593
    %vm1600 = vmor %vm1598, %vm1599
    %v1601 = vsel %vm1600, %v1593, %v1597
    %v1602 = vand.u32 2147483647, %v1592
    %vm1603 = vcmp.eq.f32.partialorder %v1602, 8.507059e+37
    %v1604 = vand.u32 %v1592, 2147483648
    %v1605 = vor.u32 1.1754944e-38, %v1604
    %v1606 = vsel %vm1603, %v1605, %v1601
    %v1607 = vmul.f32 %v1582, %v1606
    %v1608 = vmin.f32 %v1607, 1.0
    %v1609 = vmax.f32 %v1608, -1.0
    %v1610 = vadd.f32 %v369, 1.0
    %v1611 = vadd.f32 %v409, 1.0
    %v1612 = vadd.f32 %v449, 1.0
    %v1613 = vadd.f32 %v489, 1.0
    %v1614 = vadd.f32 %v529, 1.0
    %v1615 = vadd.f32 %v569, 1.0
    %v1616 = vadd.f32 %v609, 1.0
    %v1617 = vadd.f32 %v649, 1.0
    %v1618 = vadd.f32 %v689, 1.0
    %v1619 = vadd.f32 %v729, 1.0
    %v1620 = vadd.f32 %v769, 1.0
    %v1621 = vadd.f32 %v809, 1.0
    %v1622 = vadd.f32 %v849, 1.0
    %v1623 = vadd.f32 %v889, 1.0
    %v1624 = vadd.f32 %v929, 1.0
    %v1625 = vadd.f32 %v969, 1.0
    %v1626 = vadd.f32 %v1009, 1.0
    %v1627 = vadd.f32 %v1049, 1.0
    %v1628 = vadd.f32 %v1089, 1.0
    %v1629 = vadd.f32 %v1129, 1.0
    %v1630 = vadd.f32 %v1169, 1.0
    %v1631 = vadd.f32 %v1209, 1.0
    %v1632 = vadd.f32 %v1249, 1.0
    %v1633 = vadd.f32 %v1289, 1.0
    %v1634 = vadd.f32 %v1329, 1.0
    %v1635 = vadd.f32 %v1369, 1.0
    %v1636 = vadd.f32 %v1409, 1.0
    %v1637 = vadd.f32 %v1449, 1.0
    %v1638 = vadd.f32 %v1489, 1.0
    %v1639 = vadd.f32 %v1529, 1.0
    %v1640 = vadd.f32 %v1569, 1.0
    %v1641 = vadd.f32 %v1609, 1.0
    %v1642 = vmul.f32 %v266, %v1610
    %v1643 = vmul.f32 %v267, %v1611
    %v1644 = vmul.f32 %v268, %v1612
    %v1645 = vmul.f32 %v269, %v1613
    %v1646 = vmul.f32 %v270, %v1614
    %v1647 = vmul.f32 %v271, %v1615
    %v1648 = vmul.f32 %v272, %v1616
    %v1649 = vmul.f32 %v273, %v1617
    %v1650 = vmul.f32 %v274, %v1618
    %v1651 = vmul.f32 %v275, %v1619
    %v1652 = vmul.f32 %v276, %v1620
    %v1653 = vmul.f32 %v277, %v1621
    %v1654 = vmul.f32 %v278, %v1622
    %v1655 = vmul.f32 %v279, %v1623
    %v1656 = vmul.f32 %v280, %v1624
    %v1657 = vmul.f32 %v281, %v1625
    %v1658 = vmul.f32 %v282, %v1626
    %v1659 = vmul.f32 %v283, %v1627
    %v1660 = vmul.f32 %v284, %v1628
    %v1661 = vmul.f32 %v285, %v1629
    %v1662 = vmul.f32 %v286, %v1630
    %v1663 = vmul.f32 %v287, %v1631
    %v1664 = vmul.f32 %v288, %v1632
    %v1665 = vmul.f32 %v289, %v1633
    %v1666 = vmul.f32 %v290, %v1634
    %v1667 = vmul.f32 %v291, %v1635
    %v1668 = vmul.f32 %v292, %v1636
    %v1669 = vmul.f32 %v293, %v1637
    %v1670 = vmul.f32 %v294, %v1638
    %v1671 = vmul.f32 %v295, %v1639
    %v1672 = vmul.f32 %v296, %v1640
    %v1673 = vmul.f32 %v297, %v1641
    %v1674 = vld [vmem:[#allocation8] sm:$0xff]
    %v1675 = vld [vmem:[#allocation8 + $0x8] sm:$0xff]
    %v1676 = vld [vmem:[#allocation8 + $0x10] sm:$0xff]
    %v1677 = vld [vmem:[#allocation8 + $0x18] sm:$0xff]
    %v1678 = vld [vmem:[#allocation8 + $0x20] sm:$0xff]
    %v1679 = vld [vmem:[#allocation8 + $0x28] sm:$0xff]
    %v1680 = vld [vmem:[#allocation8 + $0x30] sm:$0xff]
    %v1681 = vld [vmem:[#allocation8 + $0x38] sm:$0xff]
    %v1682 = vld [vmem:[#allocation8 + $0x40] sm:$0xff]
    %v1683 = vld [vmem:[#allocation8 + $0x48] sm:$0xff]
    %v1684 = vld [vmem:[#allocation8 + $0x50] sm:$0xff]
    %v1685 = vld [vmem:[#allocation8 + $0x58] sm:$0xff]
    %v1686 = vld [vmem:[#allocation8 + $0x60] sm:$0xff]
    %v1687 = vld [vmem:[#allocation8 + $0x68] sm:$0xff]
    %v1688 = vld [vmem:[#allocation8 + $0x70] sm:$0xff]
    %v1689 = vld [vmem:[#allocation8 + $0x78] sm:$0xff]
    %v1690 = vld [vmem:[#allocation8 + $0x80] sm:$0xff]
    %v1691 = vld [vmem:[#allocation8 + $0x88] sm:$0xff]
    %v1692 = vld [vmem:[#allocation8 + $0x90] sm:$0xff]
    %v1693 = vld [vmem:[#allocation8 + $0x98] sm:$0xff]
    %v1694 = vld [vmem:[#allocation8 + $0xa0] sm:$0xff]
    %v1695 = vld [vmem:[#allocation8 + $0xa8] sm:$0xff]
    %v1696 = vld [vmem:[#allocation8 + $0xb0] sm:$0xff]
    %v1697 = vld [vmem:[#allocation8 + $0xb8] sm:$0xff]
    %v1698 = vld [vmem:[#allocation8 + $0xc0] sm:$0xff]
    %v1699 = vld [vmem:[#allocation8 + $0xc8] sm:$0xff]
    %v1700 = vld [vmem:[#allocation8 + $0xd0] sm:$0xff]
    %v1701 = vld [vmem:[#allocation8 + $0xd8] sm:$0xff]
    %v1702 = vld [vmem:[#allocation8 + $0xe0] sm:$0xff]
    %v1703 = vld [vmem:[#allocation8 + $0xe8] sm:$0xff]
    %v1704 = vld [vmem:[#allocation8 + $0xf0] sm:$0xff]
    %v1705 = vld [vmem:[#allocation8 + $0xf8] sm:$0xff]
    %1706 = vmatpush.msra.mxu0 %v1689
    %1707 = vmatpush.msra.mxu0 %v1688
    %1708 = vmatpush.msra.mxu0 %v1687
    %1709 = vmatpush.msra.mxu0 %v1686
    %1710 = vmatpush.msra.mxu0 %v1685
    %1711 = vmatpush.msra.mxu0 %v1684
    %1712 = vmatpush.msra.mxu0 %v1683
    %1713 = vmatpush.msra.mxu0 %v1682
    %1714 = vmatpush.msra.mxu0 %v1681
    %1715 = vmatpush.msra.mxu0 %v1680
    %1716 = vmatpush.msra.mxu0 %v1679
    %1717 = vmatpush.msra.mxu0 %v1678
    %1718 = vmatpush.msra.mxu0 %v1677
    %1719 = vmatpush.msra.mxu0 %v1676
    %1720 = vmatpush.msra.mxu0 %v1675
    %1721 = vmatpush.msra.mxu0 %v1674
    %1722 = vmatmul.f32.gmra.mxu0 %v1642
    %v1723 = vpop.f32.mrf.mxu0
    %v1724 = vadd.f32 0.0, %v1723
    %1725 = vmatmul.f32.gmra.mxu0 %v1644
    %v1726 = vpop.f32.mrf.mxu0
    %v1727 = vadd.f32 0.0, %v1726
    %1728 = vmatmul.f32.gmra.mxu0 %v1646
    %v1729 = vpop.f32.mrf.mxu0
    %v1730 = vadd.f32 0.0, %v1729
    %1731 = vmatmul.f32.gmra.mxu0 %v1648
    %v1732 = vpop.f32.mrf.mxu0
    %v1733 = vadd.f32 0.0, %v1732
    %1734 = vmatmul.f32.gmra.mxu0 %v1650
    %v1735 = vpop.f32.mrf.mxu0
    %v1736 = vadd.f32 0.0, %v1735
    %1737 = vmatmul.f32.gmra.mxu0 %v1652
    %v1738 = vpop.f32.mrf.mxu0
    %v1739 = vadd.f32 0.0, %v1738
    %1740 = vmatmul.f32.gmra.mxu0 %v1654
    %v1741 = vpop.f32.mrf.mxu0
    %v1742 = vadd.f32 0.0, %v1741
    %1743 = vmatmul.f32.gmra.mxu0 %v1656
    %v1744 = vpop.f32.mrf.mxu0
    %v1745 = vadd.f32 0.0, %v1744
    %1746 = vmatmul.f32.gmra.mxu0 %v1658
    %v1747 = vpop.f32.mrf.mxu0
    %v1748 = vadd.f32 0.0, %v1747
    %1749 = vmatmul.f32.gmra.mxu0 %v1660
    %v1750 = vpop.f32.mrf.mxu0
    %v1751 = vadd.f32 0.0, %v1750
    %1752 = vmatmul.f32.gmra.mxu0 %v1662
    %v1753 = vpop.f32.mrf.mxu0
    %v1754 = vadd.f32 0.0, %v1753
    %1755 = vmatmul.f32.gmra.mxu0 %v1664
    %v1756 = vpop.f32.mrf.mxu0
    %v1757 = vadd.f32 0.0, %v1756
    %1758 = vmatmul.f32.gmra.mxu0 %v1666
    %v1759 = vpop.f32.mrf.mxu0
    %v1760 = vadd.f32 0.0, %v1759
    %1761 = vmatmul.f32.gmra.mxu0 %v1668
    %v1762 = vpop.f32.mrf.mxu0
    %v1763 = vadd.f32 0.0, %v1762
    %1764 = vmatmul.f32.gmra.mxu0 %v1670
    %v1765 = vpop.f32.mrf.mxu0
    %v1766 = vadd.f32 0.0, %v1765
    %1767 = vmatmul.f32.gmra.mxu0 %v1672
    %v1768 = vpop.f32.mrf.mxu0
    %v1769 = vadd.f32 0.0, %v1768
    %1770 = vdwg.mxu0
    %1771 = vmatpush.msra.mxu0 %v1705
    %1772 = vmatpush.msra.mxu0 %v1704
    %1773 = vmatpush.msra.mxu0 %v1703
    %1774 = vmatpush.msra.mxu0 %v1702
    %1775 = vmatpush.msra.mxu0 %v1701
    %1776 = vmatpush.msra.mxu0 %v1700
    %1777 = vmatpush.msra.mxu0 %v1699
    %1778 = vmatpush.msra.mxu0 %v1698
    %1779 = vmatpush.msra.mxu0 %v1697
    %1780 = vmatpush.msra.mxu0 %v1696
    %1781 = vmatpush.msra.mxu0 %v1695
    %1782 = vmatpush.msra.mxu0 %v1694
    %1783 = vmatpush.msra.mxu0 %v1693
    %1784 = vmatpush.msra.mxu0 %v1692
    %1785 = vmatpush.msra.mxu0 %v1691
    %1786 = vmatpush.msra.mxu0 %v1690
    %1787 = vmatmul.f32.gmra.mxu0 %v1643
    %v1788 = vpop.f32.mrf.mxu0
    %v1789 = vadd.f32 %v1724, %v1788
    %1790 = vmatmul.f32.gmra.mxu0 %v1645
    %v1791 = vpop.f32.mrf.mxu0
    %v1792 = vadd.f32 %v1727, %v1791
    %1793 = vmatmul.f32.gmra.mxu0 %v1647
    %v1794 = vpop.f32.mrf.mxu0
    %v1795 = vadd.f32 %v1730, %v1794
    %1796 = vmatmul.f32.gmra.mxu0 %v1649
    %v1797 = vpop.f32.mrf.mxu0
    %v1798 = vadd.f32 %v1733, %v1797
    %1799 = vmatmul.f32.gmra.mxu0 %v1651
    %v1800 = vpop.f32.mrf.mxu0
    %v1801 = vadd.f32 %v1736, %v1800
    %1802 = vmatmul.f32.gmra.mxu0 %v1653
    %v1803 = vpop.f32.mrf.mxu0
    %v1804 = vadd.f32 %v1739, %v1803
    %1805 = vmatmul.f32.gmra.mxu0 %v1655
    %v1806 = vpop.f32.mrf.mxu0
    %v1807 = vadd.f32 %v1742, %v1806
    %1808 = vmatmul.f32.gmra.mxu0 %v1657
    %v1809 = vpop.f32.mrf.mxu0
    %v1810 = vadd.f32 %v1745, %v1809
    %1811 = vmatmul.f32.gmra.mxu0 %v1659
    %v1812 = vpop.f32.mrf.mxu0
    %v1813 = vadd.f32 %v1748, %v1812
    %1814 = vmatmul.f32.gmra.mxu0 %v1661
    %v1815 = vpop.f32.mrf.mxu0
    %v1816 = vadd.f32 %v1751, %v1815
    %1817 = vmatmul.f32.gmra.mxu0 %v1663
    %v1818 = vpop.f32.mrf.mxu0
    %v1819 = vadd.f32 %v1754, %v1818
    %1820 = vmatmul.f32.gmra.mxu0 %v1665
    %v1821 = vpop.f32.mrf.mxu0
    %v1822 = vadd.f32 %v1757, %v1821
    %1823 = vmatmul.f32.gmra.mxu0 %v1667
    %v1824 = vpop.f32.mrf.mxu0
    %v1825 = vadd.f32 %v1760, %v1824
    %1826 = vmatmul.f32.gmra.mxu0 %v1669
    %v1827 = vpop.f32.mrf.mxu0
    %v1828 = vadd.f32 %v1763, %v1827
    %1829 = vmatmul.f32.gmra.mxu0 %v1671
    %v1830 = vpop.f32.mrf.mxu0
    %v1831 = vadd.f32 %v1766, %v1830
    %1832 = vmatmul.f32.gmra.mxu0 %v1673
    %v1833 = vpop.f32.mrf.mxu0
    %v1834 = vadd.f32 %v1769, %v1833
    %1835 = vdwg.mxu0
    %p1836 = scmp.eq.s32.totalorder 0, 0
    // Predicated region
    $region38: #{_ffn_impl.1} parent=1 // pred_check
      %p1837 = pneg %p1836
    $region39: #{_ffn_impl.1} parent=1 // pred_check_branch
      %1839 = sbr.rel (%p1837) target = $region41
    $region40: #{_ffn_impl.1} parent=1 // pred_region
      %v1840 = vld [vmem:[%s4] sm:$0x1]
      %v1842 = vperm.slane %v1840, 0
      %v1844 = vadd.f32 %v1789, %v1842
      %v1845 = vadd.f32 %v1792, %v1842
      %v1846 = vadd.f32 %v1795, %v1842
      %v1847 = vadd.f32 %v1798, %v1842
      %v1848 = vadd.f32 %v1801, %v1842
      %v1849 = vadd.f32 %v1804, %v1842
      %v1850 = vadd.f32 %v1807, %v1842
      %v1851 = vadd.f32 %v1810, %v1842
      %v1852 = vadd.f32 %v1813, %v1842
      %v1853 = vadd.f32 %v1816, %v1842
      %v1854 = vadd.f32 %v1819, %v1842
      %v1855 = vadd.f32 %v1822, %v1842
      %v1856 = vadd.f32 %v1825, %v1842
      %v1857 = vadd.f32 %v1828, %v1842
      %v1858 = vadd.f32 %v1831, %v1842
      %v1859 = vadd.f32 %v1834, %v1842
      %1860 = vst [vmem:[#allocation10] sm:$0xff] %v1844
      %1861 = vst [vmem:[#allocation10 + $0x8] sm:$0xff] %v1845
      %1862 = vst [vmem:[#allocation10 + $0x10] sm:$0xff] %v1846
      %1863 = vst [vmem:[#allocation10 + $0x18] sm:$0xff] %v1847
      %1864 = vst [vmem:[#allocation10 + $0x20] sm:$0xff] %v1848
      %1865 = vst [vmem:[#allocation10 + $0x28] sm:$0xff] %v1849
      %1866 = vst [vmem:[#allocation10 + $0x30] sm:$0xff] %v1850
      %1867 = vst [vmem:[#allocation10 + $0x38] sm:$0xff] %v1851
      %1868 = vst [vmem:[#allocation10 + $0x40] sm:$0xff] %v1852
      %1869 = vst [vmem:[#allocation10 + $0x48] sm:$0xff] %v1853
      %1870 = vst [vmem:[#allocation10 + $0x50] sm:$0xff] %v1854
      %1871 = vst [vmem:[#allocation10 + $0x58] sm:$0xff] %v1855
      %1872 = vst [vmem:[#allocation10 + $0x60] sm:$0xff] %v1856
      %1873 = vst [vmem:[#allocation10 + $0x68] sm:$0xff] %v1857
      %1874 = vst [vmem:[#allocation10 + $0x70] sm:$0xff] %v1858
      %1875 = vst [vmem:[#allocation10 + $0x78] sm:$0xff] %v1859
    $region41: #{_ffn_impl.1} parent=1 // pred_fallthru
      _
    %p1876 = scmp.gt.s32.totalorder 0, 0
    // Predicated region
    $region42: #{_ffn_impl.1} parent=1 // pred_check
      %p1877 = pneg %p1876
    $region43: #{_ffn_impl.1} parent=1 // pred_check_branch
      %1879 = sbr.rel (%p1877) target = $region45
    $region44: #{_ffn_impl.1} parent=1 // pred_region
      %v1880 = vld [vmem:[#allocation10] sm:$0xff]
      %v1881 = vld [vmem:[#allocation10 + $0x8] sm:$0xff]
      %v1882 = vld [vmem:[#allocation10 + $0x10] sm:$0xff]
      %v1883 = vld [vmem:[#allocation10 + $0x18] sm:$0xff]
      %v1884 = vld [vmem:[#allocation10 + $0x20] sm:$0xff]
      %v1885 = vld [vmem:[#allocation10 + $0x28] sm:$0xff]
      %v1886 = vld [vmem:[#allocation10 + $0x30] sm:$0xff]
      %v1887 = vld [vmem:[#allocation10 + $0x38] sm:$0xff]
      %v1888 = vld [vmem:[#allocation10 + $0x40] sm:$0xff]
      %v1889 = vld [vmem:[#allocation10 + $0x48] sm:$0xff]
      %v1890 = vld [vmem:[#allocation10 + $0x50] sm:$0xff]
      %v1891 = vld [vmem:[#allocation10 + $0x58] sm:$0xff]
      %v1892 = vld [vmem:[#allocation10 + $0x60] sm:$0xff]
      %v1893 = vld [vmem:[#allocation10 + $0x68] sm:$0xff]
      %v1894 = vld [vmem:[#allocation10 + $0x70] sm:$0xff]
      %v1895 = vld [vmem:[#allocation10 + $0x78] sm:$0xff]
      %v1896 = vadd.f32 %v1880, %v1789
      %v1897 = vadd.f32 %v1881, %v1792
      %v1898 = vadd.f32 %v1882, %v1795
      %v1899 = vadd.f32 %v1883, %v1798
      %v1900 = vadd.f32 %v1884, %v1801
      %v1901 = vadd.f32 %v1885, %v1804
      %v1902 = vadd.f32 %v1886, %v1807
      %v1903 = vadd.f32 %v1887, %v1810
      %v1904 = vadd.f32 %v1888, %v1813
      %v1905 = vadd.f32 %v1889, %v1816
      %v1906 = vadd.f32 %v1890, %v1819
      %v1907 = vadd.f32 %v1891, %v1822
      %v1908 = vadd.f32 %v1892, %v1825
      %v1909 = vadd.f32 %v1893, %v1828
      %v1910 = vadd.f32 %v1894, %v1831
      %v1911 = vadd.f32 %v1895, %v1834
      %1912 = vst [vmem:[#allocation10] sm:$0xff] %v1896
      %1913 = vst [vmem:[#allocation10 + $0x8] sm:$0xff] %v1897
      %1914 = vst [vmem:[#allocation10 + $0x10] sm:$0xff] %v1898
      %1915 = vst [vmem:[#allocation10 + $0x18] sm:$0xff] %v1899
      %1916 = vst [vmem:[#allocation10 + $0x20] sm:$0xff] %v1900
      %1917 = vst [vmem:[#allocation10 + $0x28] sm:$0xff] %v1901
      %1918 = vst [vmem:[#allocation10 + $0x30] sm:$0xff] %v1902
      %1919 = vst [vmem:[#allocation10 + $0x38] sm:$0xff] %v1903
      %1920 = vst [vmem:[#allocation10 + $0x40] sm:$0xff] %v1904
      %1921 = vst [vmem:[#allocation10 + $0x48] sm:$0xff] %v1905
      %1922 = vst [vmem:[#allocation10 + $0x50] sm:$0xff] %v1906
      %1923 = vst [vmem:[#allocation10 + $0x58] sm:$0xff] %v1907
      %1924 = vst [vmem:[#allocation10 + $0x60] sm:$0xff] %v1908
      %1925 = vst [vmem:[#allocation10 + $0x68] sm:$0xff] %v1909
      %1926 = vst [vmem:[#allocation10 + $0x70] sm:$0xff] %v1910
      %1927 = vst [vmem:[#allocation10 + $0x78] sm:$0xff] %v1911
    $region45: #{_ffn_impl.1} parent=1 // pred_fallthru
      _
    // Predicated region
    $region46: #{_ffn_impl.1} parent=1 // pred_check
      _
    $region47: #{_ffn_impl.1} parent=1 // pred_check_branch
      %1929 = sbr.rel (0) target = $region49
    $region48: #{_ffn_impl.1} parent=1 // pred_region
      %1931 = vsyncadd [#allocation4], 0
      %s1932 = sshll.u32 [#allocation10], 4
      %s1933 = int_to_ptr.vmem [resolvable:$true] %s1932
      %s1934 = sshll.u32 %s5, 4
      %s1935 = int_to_ptr.hbm [resolvable:$true] %s1934
      %1940 = dma.vmem_to_hbm [thread:$0]  %s1933, 2048, %s1935, [#allocation4], 128, 128, 8
    $region49: #{_ffn_impl.1} parent=1 // pred_fallthru
      _
    // Predicated region
    $region50: #{_ffn_impl.1} parent=1 // pred_check
      _
    $region51: #{_ffn_impl.1} parent=1 // pred_check_branch
      %1942 = sbr.rel (0) target = $region53
    $region52: #{_ffn_impl.1} parent=1 // pred_region
      %1944 = dma.done [#allocation4], 2048
    $region53: #{_ffn_impl.1} parent=1 // pred_fallthru
      _
    %1945 = vsyncpa [#allocation3], 1
    %1946 = vsyncpa [#allocation6], 1
    %1947 = vsyncpa [#allocation9], 1
    %1948 = vsyncpa [#allocation4], 1

</llo_original>
